<compile_context>
chip_gen: v5e
topology: v5e:2x2
jax: 0.10.0
libtpu: 0.0.40
codegen_flags: <defaults>
</compile_context>

<pallas_src>
import functools

import jax
import jax.numpy as jnp
from jax.experimental import pallas as pl
from jax.experimental.pallas import tpu as pltpu

NEG_SLOPE = 0.1
_PAD_NEG = -1e38       # sentinel for "outside image" positions in pooling taps
_PAD_THRESH = -1e30    # anything below this is treated as padding


def _lrelu(y):
    return jnp.where(y >= 0, y, NEG_SLOPE * y)


def _tile_m(m, cap=2048):
    """Largest multiple of 128 that divides m and is <= cap (else m itself)."""
    if m % 128 != 0:
        return m
    tm = min(cap, m)
    while m % tm:
        tm -= 128
    return tm


def _parallel():
    return pltpu.CompilerParams(dimension_semantics=("parallel",))


# --------------------------------------------------------------------------
# Pallas kernels (all operate on (C, pixels) tiles: pixels on lanes)
# --------------------------------------------------------------------------

def _conv_kernel(x_ref, w_ref, b_ref, o_ref, *, apply_lrelu):
    # x: (K, TM), w: (Cout, K), b: (Cout, 1)  ->  o: (Cout, TM)
    y = jnp.dot(w_ref[...], x_ref[...], preferred_element_type=jnp.float32)
    y = y + b_ref[...]
    if apply_lrelu:
        y = _lrelu(y)
    o_ref[...] = y.astype(o_ref.dtype)


def _pool_reduce(taps_ref):
    # taps: (9, C, TM); padded positions hold _PAD_NEG.
    # max-pool: sentinel never wins (center tap is always valid).
    # avg-pool (count_include_pad=True): pad contributes 0, divide by 9.
    t0 = taps_ref[0]
    mx = t0
    sm = jnp.where(t0 > _PAD_THRESH, t0, 0.0)
    for t in range(1, 9):
        v = taps_ref[t]
        mx = jnp.maximum(mx, v)
        sm = sm + jnp.where(v > _PAD_THRESH, v, 0.0)
    return mx, sm * (1.0 / 9.0)


def _pool_kernel(taps_ref, o_ref):
    # o: (2C, TM) = [max ; avg] stacked on the channel axis
    C = taps_ref.shape[1]
    mx, av = _pool_reduce(taps_ref)
    o_ref[0:C, :] = mx.astype(o_ref.dtype)
    o_ref[C:2 * C, :] = av.astype(o_ref.dtype)


def _pool_attn2_l1_kernel(taps_ref, w2_ref, b2_ref, wl1_ref, bl1_ref,
                          attn_ref, lvl_ref):
    # Fused: cat([max_pool, avg_pool], ch) -> spatial_attn2 (1x1) -> lrelu
    #        -> spatial_attn_l1 (1x1) -> lrelu.  Two outputs.
    mx, av = _pool_reduce(taps_ref)
    pooled = jnp.concatenate([mx, av], axis=0)                   # (2C, TM)
    attn = _lrelu(jnp.dot(w2_ref[...], pooled,
                          preferred_element_type=jnp.float32) + b2_ref[...])
    attn_ref[...] = attn.astype(attn_ref.dtype)
    lvl = _lrelu(jnp.dot(wl1_ref[...], attn,
                         preferred_element_type=jnp.float32) + bl1_ref[...])
    lvl_ref[...] = lvl.astype(lvl_ref.dtype)


def _attn34_kernel(taps_ref, lvl_ref, w3_ref, b3_ref, w4_ref, b4_ref, o_ref):
    # lrelu(conv3x3(attn)) + attn_level  ->  lrelu(conv1x1(.))
    h = jnp.dot(w3_ref[...], taps_ref[...], preferred_element_type=jnp.float32)
    h = _lrelu(h + b3_ref[...]) + lvl_ref[...]
    y = jnp.dot(w4_ref[...], h, preferred_element_type=jnp.float32)
    o_ref[...] = _lrelu(y + b4_ref[...]).astype(o_ref.dtype)


def _attn5_tail_kernel(taps_ref, pf_ref, w5_ref, b5_ref,
                       w1_ref, b1_ref, w2_ref, b2_ref, o_ref):
    # attn     = conv3x3(upsampled attn)            (spatial_attn5, no lrelu)
    # attn_add = conv1x1(lrelu(conv1x1(attn)))      (add1 -> lrelu -> add2)
    # feat     = pairwise_fusion * sigmoid(attn) * 2 + attn_add
    a = jnp.dot(w5_ref[...], taps_ref[...],
                preferred_element_type=jnp.float32) + b5_ref[...]
    h = _lrelu(jnp.dot(w1_ref[...], a,
                       preferred_element_type=jnp.float32) + b1_ref[...])
    add = jnp.dot(w2_ref[...], h, preferred_element_type=jnp.float32) + b2_ref[...]
    o_ref[...] = (pf_ref[...] * jax.nn.sigmoid(a) * 2.0 + add).astype(o_ref.dtype)


# --------------------------------------------------------------------------
# Glue / wrappers.  Internal activation format: (C, N, H, W) float32.
# --------------------------------------------------------------------------

def _flat(x):
    return x.reshape(x.shape[0], -1)                             # (C, N*H*W)


def _conv_matmul(x_km, w, b, *, apply_lrelu):
    K, M = x_km.shape
    Cout = w.shape[0]
    TM = _tile_m(M)
    return pl.pallas_call(
        functools.partial(_conv_kernel, apply_lrelu=apply_lrelu),
        out_shape=jax.ShapeDtypeStruct((Cout, M), x_km.dtype),
        grid=(M // TM,),
        in_specs=[
            pl.BlockSpec((K, TM), lambda i: (0, i)),
            pl.BlockSpec((Cout, K), lambda i: (0, 0)),
            pl.BlockSpec((Cout, 1), lambda i: (0, 0)),
        ],
        out_specs=pl.BlockSpec((Cout, TM), lambda i: (0, i)),
        compiler_params=_parallel(),
    )(x_km, w, b)


def conv1x1(x, w, b, *, apply_lrelu):
    C, N, H, W = x.shape
    out = _conv_matmul(_flat(x), w, b, apply_lrelu=apply_lrelu)
    return out.reshape(-1, N, H, W)


def _conv3x3_taps(x):
    # (C, N, H, W) -> (9*C, N*H*W); tap t = 3*dy+dx, channels contiguous per tap
    C, N, H, W = x.shape
    xp = jnp.pad(x, ((0, 0), (0, 0), (1, 1), (1, 1)))
    taps = [xp[:, :, dy:dy + H, dx:dx + W].reshape(C, N * H * W)
            for dy in range(3) for dx in range(3)]
    return jnp.concatenate(taps, axis=0)


def conv3x3(x, w9, b, *, apply_lrelu):
    # w9: (Cout, 9*Cin) == torch_w.transpose(0, 2, 3, 1).reshape(Cout, 9*Cin)
    _, N, H, W = x.shape
    out = _conv_matmul(_conv3x3_taps(x), w9, b, apply_lrelu=apply_lrelu)
    return out.reshape(-1, N, H, W)


def _pool_taps(x):
    # 3x3 / stride 2 / pad 1 pooling taps, built only at output positions.
    C, N, H, W = x.shape
    Ho, Wo = H // 2, W // 2                     # even H, W assumed (k=3,s=2,p=1)
    xp = jnp.pad(x, ((0, 0), (0, 0), (1, 1), (1, 1)), constant_values=_PAD_NEG)
    taps = [xp[:, :, dy:dy + 2 * Ho - 1:2, dx:dx + 2 * Wo - 1:2]
            .reshape(C, N * Ho * Wo)
            for dy in range(3) for dx in range(3)]
    return jnp.stack(taps, axis=0), (N, Ho, Wo)                  # (9, C, Mo)


def pool_attn2_l1(x, w2, b2, wl1, bl1):
    # Fused: cat([max_pool(x), avg_pool(x)], ch) -> spatial_attn2 -> lrelu
    #        -> spatial_attn_l1 -> lrelu.  Returns (attn, attn_level) @ half-res.
    taps, (N, Ho, Wo) = _pool_taps(x)
    _, C, Mo = taps.shape
    C2, Cl = w2.shape[0], wl1.shape[0]
    TM = _tile_m(Mo)
    attn, lvl = pl.pallas_call(
        _pool_attn2_l1_kernel,
        out_shape=(jax.ShapeDtypeStruct((C2, Mo), x.dtype),
                   jax.ShapeDtypeStruct((Cl, Mo), x.dtype)),
        grid=(Mo // TM,),
        in_specs=[
            pl.BlockSpec((9, C, TM), lambda i: (0, 0, i)),
            pl.BlockSpec(w2.shape, lambda i: (0, 0)),
            pl.BlockSpec((C2, 1), lambda i: (0, 0)),
            pl.BlockSpec(wl1.shape, lambda i: (0, 0)),
            pl.BlockSpec((Cl, 1), lambda i: (0, 0)),
        ],
        out_specs=[
            pl.BlockSpec((C2, TM), lambda i: (0, i)),
            pl.BlockSpec((Cl, TM), lambda i: (0, i)),
        ],
        compiler_params=_parallel(),
    )(taps, w2, b2, wl1, bl1)
    return attn.reshape(C2, N, Ho, Wo), lvl.reshape(Cl, N, Ho, Wo)


def pool_cat(x):
    # cat([max_pool(x), avg_pool(x)], ch), stride-2 output resolution
    taps, (N, Ho, Wo) = _pool_taps(x)
    _, C, Mo = taps.shape
    TM = _tile_m(Mo)
    out = pl.pallas_call(
        _pool_kernel,
        out_shape=jax.ShapeDtypeStruct((2 * C, Mo), x.dtype),
        grid=(Mo // TM,),
        in_specs=[pl.BlockSpec((9, C, TM), lambda i: (0, 0, i))],
        out_specs=pl.BlockSpec((2 * C, TM), lambda i: (0, i)),
        compiler_params=_parallel(),
    )(taps)
    return out.reshape(2 * C, N, Ho, Wo)


def attn3_add_attn4(attn, attn_level, w3, b3, w4, b4):
    # Fused: lrelu(attn3_3x3(attn)) + attn_level -> lrelu(attn4_1x1(.))
    C, N, H, W = attn.shape
    taps = _conv3x3_taps(attn)                                   # (9C, M)
    M = taps.shape[1]
    Cl = attn_level.shape[0]
    Cout = w4.shape[0]
    TM = _tile_m(M)
    out = pl.pallas_call(
        _attn34_kernel,
        out_shape=jax.ShapeDtypeStruct((Cout, M), attn.dtype),
        grid=(M // TM,),
        in_specs=[
            pl.BlockSpec((9 * C, TM), lambda i: (0, i)),
            pl.BlockSpec((Cl, TM), lambda i: (0, i)),
            pl.BlockSpec(w3.shape, lambda i: (0, 0)),
            pl.BlockSpec((w3.shape[0], 1), lambda i: (0, 0)),
            pl.BlockSpec(w4.shape, lambda i: (0, 0)),
            pl.BlockSpec((Cout, 1), lambda i: (0, 0)),
        ],
        out_specs=pl.BlockSpec((Cout, TM), lambda i: (0, i)),
        compiler_params=_parallel(),
    )(taps, _flat(attn_level), w3, b3, w4, b4)
    return out.reshape(Cout, N, H, W)


def attn5_tail(attn_up, pf, w5, b5, w1, b1, w2, b2):
    # Fused: spatial_attn5 (3x3) -> [attn_add chain, sigmoid*2*pf + attn_add]
    C, N, H, W = attn_up.shape
    taps = _conv3x3_taps(attn_up)                                # (9C, M)
    K, M = taps.shape
    Cp = pf.shape[0]
    C5 = w5.shape[0]
    C1 = w1.shape[0]
    Cout = w2.shape[0]
    TM = _tile_m(M)
    out = pl.pallas_call(
        _attn5_tail_kernel,
        out_shape=jax.ShapeDtypeStruct((Cout, M), pf.dtype),
        grid=(M // TM,),
        in_specs=[
            pl.BlockSpec((K, TM), lambda i: (0, i)),
            pl.BlockSpec((Cp, TM), lambda i: (0, i)),
            pl.BlockSpec(w5.shape, lambda i: (0, 0)),
            pl.BlockSpec((C5, 1), lambda i: (0, 0)),
            pl.BlockSpec(w1.shape, lambda i: (0, 0)),
            pl.BlockSpec((C1, 1), lambda i: (0, 0)),
            pl.BlockSpec(w2.shape, lambda i: (0, 0)),
            pl.BlockSpec((Cout, 1), lambda i: (0, 0)),
        ],
        out_specs=pl.BlockSpec((Cout, TM), lambda i: (0, i)),
        compiler_params=_parallel(),
    )(taps, _flat(pf), w5, b5, w1, b1, w2, b2)
    return out.reshape(Cout, N, H, W)


def upsample2x_bilinear(x):
    # TODO(synk): bilinear 2x upsample (align_corners=False, matching
    # nn.Upsample) kept in plain JAX glue; gather-free: edge-pad shift + lerp
    # + interleave reshape (out[2i] = .25*x[i-1] + .75*x[i],
    #                       out[2i+1] = .75*x[i] + .25*x[i+1], clamped).
    C, N, H, W = x.shape
    prev = jnp.concatenate([x[:, :, :1], x[:, :, :-1]], axis=2)
    nxt = jnp.concatenate([x[:, :, 1:], x[:, :, -1:]], axis=2)
    even = 0.25 * prev + 0.75 * x
    odd = 0.75 * x + 0.25 * nxt
    x = jnp.stack([even, odd], axis=3).reshape(C, N, 2 * H, W)
    prev = jnp.concatenate([x[..., :1], x[..., :-1]], axis=3)
    nxt = jnp.concatenate([x[..., 1:], x[..., -1:]], axis=3)
    even = 0.25 * prev + 0.75 * x
    odd = 0.75 * x + 0.25 * nxt
    return jnp.stack([even, odd], axis=4).reshape(C, N, 2 * H, 2 * W)


# --------------------------------------------------------------------------
# Parameters (synthetic, deterministic) — stored in kernel layout:
#   1x1: (Cout, Cin);  3x3: (Cout, 9*Cin) (== torch.transpose(0,2,3,1).reshape)
#   bias: (Cout, 1)
# --------------------------------------------------------------------------

def init_params(key, num_feat=16, num_frame=3):
    F = num_feat
    specs = {
        'spatial_attn1':     ('1x1', num_frame * F, F),
        'spatial_attn2':     ('1x1', 2 * F, F),
        'spatial_attn3':     ('3x3', F, F),
        'spatial_attn4':     ('1x1', F, F),
        'spatial_attn5':     ('3x3', F, F),
        'spatial_attn_l1':   ('1x1', F, F),
        'spatial_attn_l2':   ('3x3', 2 * F, F),
        'spatial_attn_l3':   ('3x3', F, F),
        'spatial_attn_add1': ('1x1', F, F),
        'spatial_attn_add2': ('1x1', F, F),
    }
    params = {}
    keys = jax.random.split(key, 2 * len(specs))
    for idx, (name, (kind, cin, cout)) in enumerate(specs.items()):
        kw, kb = keys[2 * idx], keys[2 * idx + 1]
        if kind == '1x1':
            w = jax.random.normal(kw, (cout, cin), jnp.float32) * 0.1
        else:
            w = jax.random.normal(kw, (cout, 9 * cin), jnp.float32) * 0.05
        b = jax.random.normal(kb, (cout, 1), jnp.float32) * 0.01
        params[name] = (w, b)
    return params


# --------------------------------------------------------------------------
# Forward (mirrors SpatialAttention.forward)
# --------------------------------------------------------------------------

def spatial_attention_forward(params, pairwise_fusion, exposure_list):
    # NCHW -> internal (C, N, H, W)
    to_int = lambda t: jnp.transpose(t, (1, 0, 2, 3))
    pf = to_int(pairwise_fusion)
    e = [to_int(t) for t in exposure_list]

    x = jnp.concatenate([e[1], e[0], e[2]], axis=0)                 # channel cat
    attn = conv1x1(x, *params['spatial_attn1'], apply_lrelu=True)   # full res

    # fused (max_pool ++ avg_pool) -> attn2 -> lrelu -> attn_l1 -> lrelu
    attn, attn_level = pool_attn2_l1(
        attn, *params['spatial_attn2'], *params['spatial_attn_l1'])

    pooled = pool_cat(attn_level)                                   # half -> quarter
    attn_level = conv3x3(pooled, *params['spatial_attn_l2'], apply_lrelu=True)
    attn_level = conv3x3(attn_level, *params['spatial_attn_l3'], apply_lrelu=True)
    attn_level = upsample2x_bilinear(attn_level)                    # quarter -> half

    # fused lrelu(attn3(attn)) + attn_level -> lrelu(attn4(.))
    attn = attn3_add_attn4(attn, attn_level,
                           *params['spatial_attn3'], *params['spatial_attn4'])
    attn = upsample2x_bilinear(attn)                                # half -> full

    # fused attn5 (3x3) + attn_add chain + sigmoid/scale/add
    feat = attn5_tail(attn, pf,
                      *params['spatial_attn5'],
                      *params['spatial_attn_add1'],
                      *params['spatial_attn_add2'])
    return jnp.transpose(feat, (1, 0, 2, 3))                        # back to NCHW


# --------------------------------------------------------------------------

if __name__ == "__main__":
    key = jax.random.PRNGKey(0)
    N, F, H, W = 2, 16, 16, 16  # batch=2, num_feat=16, spatial 16x16

    kp, k0, k1, k2, k3 = jax.random.split(key, 5)
    params = init_params(kp, num_feat=F, num_frame=3)
    pairwise_fusion = jax.random.normal(k0, (N, F, H, W), jnp.float32)
    exposure_list = [jax.random.normal(k, (N, F, H, W), jnp.float32)
                     for k in (k1, k2, k3)]

    fwd = jax.jit(spatial_attention_forward)
    out = jax.block_until_ready(fwd(params, pairwise_fusion, exposure_list))
    assert out.shape == (N, F, H, W) and out.dtype == jnp.float32
    print("KERNEL_OK")
</pallas_src>

<mosaic_0001>
module attributes {stable_mosaic.version = 11 : i64} {
  func.func @_conv_kernel(%arg0: i32, %arg1: memref<48x512xf32, #tpu.memory_space<vmem>>, %arg2: memref<16x48xf32, #tpu.memory_space<vmem>>, %arg3: memref<16x1xf32, #tpu.memory_space<vmem>>, %arg4: memref<16x512xf32, #tpu.memory_space<vmem>>) attributes {dimension_semantics = [#tpu.dimension_semantics<parallel>], iteration_bounds = array<i64: 1>, scalar_prefetch = 0 : i64, scratch_operands = 0 : i64, tpu.core_type = #tpu.core_type<tc>, window_params = [{transform_indices = @transform_0, window_bounds = array<i64: 48, 512>}, {pipeline_mode = #tpu.pipeline_mode<synchronous>, transform_indices = @transform_1, window_bounds = array<i64: 16, 48>}, {pipeline_mode = #tpu.pipeline_mode<synchronous>, transform_indices = @transform_2, window_bounds = array<i64: 16, 1>}, {transform_indices = @transform_3, window_bounds = array<i64: 16, 512>}]} {
    %c0 = arith.constant 0 : index
    %c0_0 = arith.constant 0 : index
    %0 = vector.load %arg2[%c0, %c0_0] : memref<16x48xf32, #tpu.memory_space<vmem>>, vector<16x48xf32>
    %c0_1 = arith.constant 0 : index
    %c0_2 = arith.constant 0 : index
    %1 = vector.load %arg1[%c0_1, %c0_2] : memref<48x512xf32, #tpu.memory_space<vmem>>, vector<48x512xf32>
    %cst = arith.constant dense<0.000000e+00> : vector<16x512xf32>
    %2 = tpu.matmul %0, %1, %cst {dimension_numbers = #tpu.dot_dimension_numbers<[1], [0], [0], [1], [0, 0, 1, 1], [], []>} : vector<16x48xf32>, vector<48x512xf32>, vector<16x512xf32> -> vector<16x512xf32>
    %c0_3 = arith.constant 0 : index
    %c0_4 = arith.constant 0 : index
    %3 = vector.load %arg3[%c0_3, %c0_4] : memref<16x1xf32, #tpu.memory_space<vmem>>, vector<16x1xf32>
    %4 = vector.broadcast %3 : vector<16x1xf32> to vector<16x512xf32>
    %5 = arith.addf %2, %4 : vector<16x512xf32>
    %cst_5 = arith.constant 0.000000e+00 : f32
    %6 = vector.broadcast %cst_5 : f32 to vector<16x512xf32>
    %7 = arith.cmpf oge, %5, %6 : vector<16x512xf32>
    %cst_6 = arith.constant 1.000000e-01 : f32
    %8 = vector.broadcast %cst_6 : f32 to vector<16x512xf32>
    %9 = arith.mulf %8, %5 : vector<16x512xf32>
    %10 = arith.select %7, %5, %9 : vector<16x512xi1>, vector<16x512xf32>
    %c0_7 = arith.constant 0 : index
    %c0_8 = arith.constant 0 : index
    %11 = vector.load %arg4[%c0_7, %c0_8] : memref<16x512xf32, #tpu.memory_space<vmem>>, vector<16x512xf32>
    tpu.vector_store %arg4[%c0_7, %c0_8], %10 {strides = array<i32>} : memref<16x512xf32, #tpu.memory_space<vmem>>, vector<16x512xf32>,
    return
  }
  func.func @transform_0(%arg0: i32) -> (i32, i32) {
    %c0_i32 = arith.constant 0 : i32
    %c0_i32_0 = arith.constant 0 : i32
    return %c0_i32, %arg0 : i32, i32
  }
  func.func @transform_1(%arg0: i32) -> (i32, i32) {
    %c0_i32 = arith.constant 0 : i32
    %c0_i32_0 = arith.constant 0 : i32
    %c0_i32_1 = arith.constant 0 : i32
    return %c0_i32, %c0_i32_0 : i32, i32
  }
  func.func @transform_2(%arg0: i32) -> (i32, i32) {
    %c0_i32 = arith.constant 0 : i32
    %c0_i32_0 = arith.constant 0 : i32
    %c0_i32_1 = arith.constant 0 : i32
    return %c0_i32, %c0_i32_0 : i32, i32
  }
  func.func @transform_3(%arg0: i32) -> (i32, i32) {
    %c0_i32 = arith.constant 0 : i32
    %c0_i32_0 = arith.constant 0 : i32
    return %c0_i32, %arg0 : i32, i32
  }
}

module attributes {stable_mosaic.version = 11 : i64} {
  func.func @_pool_attn2_l1_kernel(%arg0: i32, %arg1: memref<9x16x128xf32, #tpu.memory_space<vmem>>, %arg2: memref<16x32xf32, #tpu.memory_space<vmem>>, %arg3: memref<16x1xf32, #tpu.memory_space<vmem>>, %arg4: memref<16x16xf32, #tpu.memory_space<vmem>>, %arg5: memref<16x1xf32, #tpu.memory_space<vmem>>, %arg6: memref<16x128xf32, #tpu.memory_space<vmem>>, %arg7: memref<16x128xf32, #tpu.memory_space<vmem>>) attributes {dimension_semantics = [#tpu.dimension_semantics<parallel>], iteration_bounds = array<i64: 1>, scalar_prefetch = 0 : i64, scratch_operands = 0 : i64, tpu.core_type = #tpu.core_type<tc>, window_params = [{transform_indices = @transform_0, window_bounds = array<i64: 9, 16, 128>}, {pipeline_mode = #tpu.pipeline_mode<synchronous>, transform_indices = @transform_1, window_bounds = array<i64: 16, 32>}, {pipeline_mode = #tpu.pipeline_mode<synchronous>, transform_indices = @transform_2, window_bounds = array<i64: 16, 1>}, {pipeline_mode = #tpu.pipeline_mode<synchronous>, transform_indices = @transform_3, window_bounds = array<i64: 16, 16>}, {pipeline_mode = #tpu.pipeline_mode<synchronous>, transform_indices = @transform_4, window_bounds = array<i64: 16, 1>}, {transform_indices = @transform_5, window_bounds = array<i64: 16, 128>}, {transform_indices = @transform_6, window_bounds = array<i64: 16, 128>}]} {
    %c0 = arith.constant 0 : index
    %c0_0 = arith.constant 0 : index
    %c0_1 = arith.constant 0 : index
    %0 = vector.load %arg1[%c0, %c0_0, %c0_1] : memref<9x16x128xf32, #tpu.memory_space<vmem>>, vector<1x16x128xf32>
    %1 = vector.shape_cast %0 : vector<1x16x128xf32> to vector<16x128xf32>
    %cst = arith.constant -1.000000e+30 : f32
    %2 = vector.broadcast %cst : f32 to vector<16x128xf32>
    %3 = arith.cmpf ogt, %1, %2 : vector<16x128xf32>
    %cst_2 = arith.constant 0.000000e+00 : f32
    %4 = vector.broadcast %cst_2 : f32 to vector<16x128xf32>
    %5 = arith.select %3, %1, %4 : vector<16x128xi1>, vector<16x128xf32>
    %c1 = arith.constant 1 : index
    %c0_3 = arith.constant 0 : index
    %c0_4 = arith.constant 0 : index
    %6 = vector.load %arg1[%c1, %c0_3, %c0_4] : memref<9x16x128xf32, #tpu.memory_space<vmem>>, vector<1x16x128xf32>
    %7 = vector.shape_cast %6 : vector<1x16x128xf32> to vector<16x128xf32>
    %8 = arith.maximumf %1, %7 : vector<16x128xf32>
    %cst_5 = arith.constant -1.000000e+30 : f32
    %9 = vector.broadcast %cst_5 : f32 to vector<16x128xf32>
    %10 = arith.cmpf ogt, %7, %9 : vector<16x128xf32>
    %cst_6 = arith.constant 0.000000e+00 : f32
    %11 = vector.broadcast %cst_6 : f32 to vector<16x128xf32>
    %12 = arith.select %10, %7, %11 : vector<16x128xi1>, vector<16x128xf32>
    %13 = arith.addf %5, %12 : vector<16x128xf32>
    %c2 = arith.constant 2 : index
    %c0_7 = arith.constant 0 : index
    %c0_8 = arith.constant 0 : index
    %14 = vector.load %arg1[%c2, %c0_7, %c0_8] : memref<9x16x128xf32, #tpu.memory_space<vmem>>, vector<1x16x128xf32>
    %15 = vector.shape_cast %14 : vector<1x16x128xf32> to vector<16x128xf32>
    %16 = arith.maximumf %8, %15 : vector<16x128xf32>
    %cst_9 = arith.constant -1.000000e+30 : f32
    %17 = vector.broadcast %cst_9 : f32 to vector<16x128xf32>
    %18 = arith.cmpf ogt, %15, %17 : vector<16x128xf32>
    %cst_10 = arith.constant 0.000000e+00 : f32
    %19 = vector.broadcast %cst_10 : f32 to vector<16x128xf32>
    %20 = arith.select %18, %15, %19 : vector<16x128xi1>, vector<16x128xf32>
    %21 = arith.addf %13, %20 : vector<16x128xf32>
    %c3 = arith.constant 3 : index
    %c0_11 = arith.constant 0 : index
    %c0_12 = arith.constant 0 : index
    %22 = vector.load %arg1[%c3, %c0_11, %c0_12] : memref<9x16x128xf32, #tpu.memory_space<vmem>>, vector<1x16x128xf32>
    %23 = vector.shape_cast %22 : vector<1x16x128xf32> to vector<16x128xf32>
    %24 = arith.maximumf %16, %23 : vector<16x128xf32>
    %cst_13 = arith.constant -1.000000e+30 : f32
    %25 = vector.broadcast %cst_13 : f32 to vector<16x128xf32>
    %26 = arith.cmpf ogt, %23, %25 : vector<16x128xf32>
    %cst_14 = arith.constant 0.000000e+00 : f32
    %27 = vector.broadcast %cst_14 : f32 to vector<16x128xf32>
    %28 = arith.select %26, %23, %27 : vector<16x128xi1>, vector<16x128xf32>
    %29 = arith.addf %21, %28 : vector<16x128xf32>
    %c4 = arith.constant 4 : index
    %c0_15 = arith.constant 0 : index
    %c0_16 = arith.constant 0 : index
    %30 = vector.load %arg1[%c4, %c0_15, %c0_16] : memref<9x16x128xf32, #tpu.memory_space<vmem>>, vector<1x16x128xf32>
    %31 = vector.shape_cast %30 : vector<1x16x128xf32> to vector<16x128xf32>
    %32 = arith.maximumf %24, %31 : vector<16x128xf32>
    %cst_17 = arith.constant -1.000000e+30 : f32
    %33 = vector.broadcast %cst_17 : f32 to vector<16x128xf32>
    %34 = arith.cmpf ogt, %31, %33 : vector<16x128xf32>
    %cst_18 = arith.constant 0.000000e+00 : f32
    %35 = vector.broadcast %cst_18 : f32 to vector<16x128xf32>
    %36 = arith.select %34, %31, %35 : vector<16x128xi1>, vector<16x128xf32>
    %37 = arith.addf %29, %36 : vector<16x128xf32>
    %c5 = arith.constant 5 : index
    %c0_19 = arith.constant 0 : index
    %c0_20 = arith.constant 0 : index
    %38 = vector.load %arg1[%c5, %c0_19, %c0_20] : memref<9x16x128xf32, #tpu.memory_space<vmem>>, vector<1x16x128xf32>
    %39 = vector.shape_cast %38 : vector<1x16x128xf32> to vector<16x128xf32>
    %40 = arith.maximumf %32, %39 : vector<16x128xf32>
    %cst_21 = arith.constant -1.000000e+30 : f32
    %41 = vector.broadcast %cst_21 : f32 to vector<16x128xf32>
    %42 = arith.cmpf ogt, %39, %41 : vector<16x128xf32>
    %cst_22 = arith.constant 0.000000e+00 : f32
    %43 = vector.broadcast %cst_22 : f32 to vector<16x128xf32>
    %44 = arith.select %42, %39, %43 : vector<16x128xi1>, vector<16x128xf32>
    %45 = arith.addf %37, %44 : vector<16x128xf32>
    %c6 = arith.constant 6 : index
    %c0_23 = arith.constant 0 : index
    %c0_24 = arith.constant 0 : index
    %46 = vector.load %arg1[%c6, %c0_23, %c0_24] : memref<9x16x128xf32, #tpu.memory_space<vmem>>, vector<1x16x128xf32>
    %47 = vector.shape_cast %46 : vector<1x16x128xf32> to vector<16x128xf32>
    %48 = arith.maximumf %40, %47 : vector<16x128xf32>
    %cst_25 = arith.constant -1.000000e+30 : f32
    %49 = vector.broadcast %cst_25 : f32 to vector<16x128xf32>
    %50 = arith.cmpf ogt, %47, %49 : vector<16x128xf32>
    %cst_26 = arith.constant 0.000000e+00 : f32
    %51 = vector.broadcast %cst_26 : f32 to vector<16x128xf32>
    %52 = arith.select %50, %47, %51 : vector<16x128xi1>, vector<16x128xf32>
    %53 = arith.addf %45, %52 : vector<16x128xf32>
    %c7 = arith.constant 7 : index
    %c0_27 = arith.constant 0 : index
    %c0_28 = arith.constant 0 : index
    %54 = vector.load %arg1[%c7, %c0_27, %c0_28] : memref<9x16x128xf32, #tpu.memory_space<vmem>>, vector<1x16x128xf32>
    %55 = vector.shape_cast %54 : vector<1x16x128xf32> to vector<16x128xf32>
    %56 = arith.maximumf %48, %55 : vector<16x128xf32>
    %cst_29 = arith.constant -1.000000e+30 : f32
    %57 = vector.broadcast %cst_29 : f32 to vector<16x128xf32>
    %58 = arith.cmpf ogt, %55, %57 : vector<16x128xf32>
    %cst_30 = arith.constant 0.000000e+00 : f32
    %59 = vector.broadcast %cst_30 : f32 to vector<16x128xf32>
    %60 = arith.select %58, %55, %59 : vector<16x128xi1>, vector<16x128xf32>
    %61 = arith.addf %53, %60 : vector<16x128xf32>
    %c8 = arith.constant 8 : index
    %c0_31 = arith.constant 0 : index
    %c0_32 = arith.constant 0 : index
    %62 = vector.load %arg1[%c8, %c0_31, %c0_32] : memref<9x16x128xf32, #tpu.memory_space<vmem>>, vector<1x16x128xf32>
    %63 = vector.shape_cast %62 : vector<1x16x128xf32> to vector<16x128xf32>
    %64 = arith.maximumf %56, %63 : vector<16x128xf32>
    %cst_33 = arith.constant -1.000000e+30 : f32
    %65 = vector.broadcast %cst_33 : f32 to vector<16x128xf32>
    %66 = arith.cmpf ogt, %63, %65 : vector<16x128xf32>
    %cst_34 = arith.constant 0.000000e+00 : f32
    %67 = vector.broadcast %cst_34 : f32 to vector<16x128xf32>
    %68 = arith.select %66, %63, %67 : vector<16x128xi1>, vector<16x128xf32>
    %69 = arith.addf %61, %68 : vector<16x128xf32>
    %cst_35 = arith.constant 0.111111112 : f32
    %70 = vector.broadcast %cst_35 : f32 to vector<16x128xf32>
    %71 = arith.mulf %69, %70 : vector<16x128xf32>
    %72 = tpu.concatenate %64, %71 in 0 : vector<16x128xf32>, vector<16x128xf32> -> vector<32x128xf32>
    %c0_36 = arith.constant 0 : index
    %c0_37 = arith.constant 0 : index
    %73 = vector.load %arg2[%c0_36, %c0_37] : memref<16x32xf32, #tpu.memory_space<vmem>>, vector<16x32xf32>
    %cst_38 = arith.constant dense<0.000000e+00> : vector<16x128xf32>
    %74 = tpu.matmul %73, %72, %cst_38 {dimension_numbers = #tpu.dot_dimension_numbers<[1], [0], [0], [1], [0, 0, 1, 1], [], []>} : vector<16x32xf32>, vector<32x128xf32>, vector<16x128xf32> -> vector<16x128xf32>
    %c0_39 = arith.constant 0 : index
    %c0_40 = arith.constant 0 : index
    %75 = vector.load %arg3[%c0_39, %c0_40] : memref<16x1xf32, #tpu.memory_space<vmem>>, vector<16x1xf32>
    %76 = vector.broadcast %75 : vector<16x1xf32> to vector<16x128xf32>
    %77 = arith.addf %74, %76 : vector<16x128xf32>
    %cst_41 = arith.constant 0.000000e+00 : f32
    %78 = vector.broadcast %cst_41 : f32 to vector<16x128xf32>
    %79 = arith.cmpf oge, %77, %78 : vector<16x128xf32>
    %cst_42 = arith.constant 1.000000e-01 : f32
    %80 = vector.broadcast %cst_42 : f32 to vector<16x128xf32>
    %81 = arith.mulf %80, %77 : vector<16x128xf32>
    %82 = arith.select %79, %77, %81 : vector<16x128xi1>, vector<16x128xf32>
    %c0_43 = arith.constant 0 : index
    %c0_44 = arith.constant 0 : index
    %83 = vector.load %arg6[%c0_43, %c0_44] : memref<16x128xf32, #tpu.memory_space<vmem>>, vector<16x128xf32>
    tpu.vector_store %arg6[%c0_43, %c0_44], %82 {strides = array<i32>} : memref<16x128xf32, #tpu.memory_space<vmem>>, vector<16x128xf32>,
    %c0_45 = arith.constant 0 : index
    %c0_46 = arith.constant 0 : index
    %84 = vector.load %arg4[%c0_45, %c0_46] : memref<16x16xf32, #tpu.memory_space<vmem>>, vector<16x16xf32>
    %cst_47 = arith.constant dense<0.000000e+00> : vector<16x128xf32>
    %85 = tpu.matmul %84, %82, %cst_47 {dimension_numbers = #tpu.dot_dimension_numbers<[1], [0], [0], [1], [0, 0, 1, 1], [], []>} : vector<16x16xf32>, vector<16x128xf32>, vector<16x128xf32> -> vector<16x128xf32>
    %c0_48 = arith.constant 0 : index
    %c0_49 = arith.constant 0 : index
    %86 = vector.load %arg5[%c0_48, %c0_49] : memref<16x1xf32, #tpu.memory_space<vmem>>, vector<16x1xf32>
    %87 = vector.broadcast %86 : vector<16x1xf32> to vector<16x128xf32>
    %88 = arith.addf %85, %87 : vector<16x128xf32>
    %cst_50 = arith.constant 0.000000e+00 : f32
    %89 = vector.broadcast %cst_50 : f32 to vector<16x128xf32>
    %90 = arith.cmpf oge, %88, %89 : vector<16x128xf32>
    %cst_51 = arith.constant 1.000000e-01 : f32
    %91 = vector.broadcast %cst_51 : f32 to vector<16x128xf32>
    %92 = arith.mulf %91, %88 : vector<16x128xf32>
    %93 = arith.select %90, %88, %92 : vector<16x128xi1>, vector<16x128xf32>
    %c0_52 = arith.constant 0 : index
    %c0_53 = arith.constant 0 : index
    %94 = vector.load %arg7[%c0_52, %c0_53] : memref<16x128xf32, #tpu.memory_space<vmem>>, vector<16x128xf32>
    tpu.vector_store %arg7[%c0_52, %c0_53], %93 {strides = array<i32>} : memref<16x128xf32, #tpu.memory_space<vmem>>, vector<16x128xf32>,
    return
  }
  func.func @transform_0(%arg0: i32) -> (i32, i32, i32) {
    %c0_i32 = arith.constant 0 : i32
    %c0_i32_0 = arith.constant 0 : i32
    %c0_i32_1 = arith.constant 0 : i32
    return %c0_i32, %c0_i32_0, %arg0 : i32, i32, i32
  }
  func.func @transform_1(%arg0: i32) -> (i32, i32) {
    %c0_i32 = arith.constant 0 : i32
    %c0_i32_0 = arith.constant 0 : i32
    %c0_i32_1 = arith.constant 0 : i32
    return %c0_i32, %c0_i32_0 : i32, i32
  }
  func.func @transform_2(%arg0: i32) -> (i32, i32) {
    %c0_i32 = arith.constant 0 : i32
    %c0_i32_0 = arith.constant 0 : i32
    %c0_i32_1 = arith.constant 0 : i32
    return %c0_i32, %c0_i32_0 : i32, i32
  }
  func.func @transform_3(%arg0: i32) -> (i32, i32) {
    %c0_i32 = arith.constant 0 : i32
    %c0_i32_0 = arith.constant 0 : i32
    %c0_i32_1 = arith.constant 0 : i32
    return %c0_i32, %c0_i32_0 : i32, i32
  }
  func.func @transform_4(%arg0: i32) -> (i32, i32) {
    %c0_i32 = arith.constant 0 : i32
    %c0_i32_0 = arith.constant 0 : i32
    %c0_i32_1 = arith.constant 0 : i32
    return %c0_i32, %c0_i32_0 : i32, i32
  }
  func.func @transform_5(%arg0: i32) -> (i32, i32) {
    %c0_i32 = arith.constant 0 : i32
    %c0_i32_0 = arith.constant 0 : i32
    return %c0_i32, %arg0 : i32, i32
  }
  func.func @transform_6(%arg0: i32) -> (i32, i32) {
    %c0_i32 = arith.constant 0 : i32
    %c0_i32_0 = arith.constant 0 : i32
    return %c0_i32, %arg0 : i32, i32
  }
}

module attributes {stable_mosaic.version = 11 : i64} {
  func.func @_pool_kernel(%arg0: i32, %arg1: memref<9x16x32xf32, #tpu.memory_space<vmem>>, %arg2: memref<32x32xf32, #tpu.memory_space<vmem>>) attributes {dimension_semantics = [#tpu.dimension_semantics<parallel>], iteration_bounds = array<i64: 1>, scalar_prefetch = 0 : i64, scratch_operands = 0 : i64, tpu.core_type = #tpu.core_type<tc>, window_params = [{transform_indices = @transform_0, window_bounds = array<i64: 9, 16, 32>}, {transform_indices = @transform_1, window_bounds = array<i64: 32, 32>}]} {
    %c0 = arith.constant 0 : index
    %c0_0 = arith.constant 0 : index
    %c0_1 = arith.constant 0 : index
    %0 = vector.load %arg1[%c0, %c0_0, %c0_1] : memref<9x16x32xf32, #tpu.memory_space<vmem>>, vector<1x16x32xf32>
    %1 = vector.shape_cast %0 : vector<1x16x32xf32> to vector<16x32xf32>
    %cst = arith.constant -1.000000e+30 : f32
    %2 = vector.broadcast %cst : f32 to vector<16x32xf32>
    %3 = arith.cmpf ogt, %1, %2 : vector<16x32xf32>
    %cst_2 = arith.constant 0.000000e+00 : f32
    %4 = vector.broadcast %cst_2 : f32 to vector<16x32xf32>
    %5 = arith.select %3, %1, %4 : vector<16x32xi1>, vector<16x32xf32>
    %c1 = arith.constant 1 : index
    %c0_3 = arith.constant 0 : index
    %c0_4 = arith.constant 0 : index
    %6 = vector.load %arg1[%c1, %c0_3, %c0_4] : memref<9x16x32xf32, #tpu.memory_space<vmem>>, vector<1x16x32xf32>
    %7 = vector.shape_cast %6 : vector<1x16x32xf32> to vector<16x32xf32>
    %8 = arith.maximumf %1, %7 : vector<16x32xf32>
    %cst_5 = arith.constant -1.000000e+30 : f32
    %9 = vector.broadcast %cst_5 : f32 to vector<16x32xf32>
    %10 = arith.cmpf ogt, %7, %9 : vector<16x32xf32>
    %cst_6 = arith.constant 0.000000e+00 : f32
    %11 = vector.broadcast %cst_6 : f32 to vector<16x32xf32>
    %12 = arith.select %10, %7, %11 : vector<16x32xi1>, vector<16x32xf32>
    %13 = arith.addf %5, %12 : vector<16x32xf32>
    %c2 = arith.constant 2 : index
    %c0_7 = arith.constant 0 : index
    %c0_8 = arith.constant 0 : index
    %14 = vector.load %arg1[%c2, %c0_7, %c0_8] : memref<9x16x32xf32, #tpu.memory_space<vmem>>, vector<1x16x32xf32>
    %15 = vector.shape_cast %14 : vector<1x16x32xf32> to vector<16x32xf32>
    %16 = arith.maximumf %8, %15 : vector<16x32xf32>
    %cst_9 = arith.constant -1.000000e+30 : f32
    %17 = vector.broadcast %cst_9 : f32 to vector<16x32xf32>
    %18 = arith.cmpf ogt, %15, %17 : vector<16x32xf32>
    %cst_10 = arith.constant 0.000000e+00 : f32
    %19 = vector.broadcast %cst_10 : f32 to vector<16x32xf32>
    %20 = arith.select %18, %15, %19 : vector<16x32xi1>, vector<16x32xf32>
    %21 = arith.addf %13, %20 : vector<16x32xf32>
    %c3 = arith.constant 3 : index
    %c0_11 = arith.constant 0 : index
    %c0_12 = arith.constant 0 : index
    %22 = vector.load %arg1[%c3, %c0_11, %c0_12] : memref<9x16x32xf32, #tpu.memory_space<vmem>>, vector<1x16x32xf32>
    %23 = vector.shape_cast %22 : vector<1x16x32xf32> to vector<16x32xf32>
    %24 = arith.maximumf %16, %23 : vector<16x32xf32>
    %cst_13 = arith.constant -1.000000e+30 : f32
    %25 = vector.broadcast %cst_13 : f32 to vector<16x32xf32>
    %26 = arith.cmpf ogt, %23, %25 : vector<16x32xf32>
    %cst_14 = arith.constant 0.000000e+00 : f32
    %27 = vector.broadcast %cst_14 : f32 to vector<16x32xf32>
    %28 = arith.select %26, %23, %27 : vector<16x32xi1>, vector<16x32xf32>
    %29 = arith.addf %21, %28 : vector<16x32xf32>
    %c4 = arith.constant 4 : index
    %c0_15 = arith.constant 0 : index
    %c0_16 = arith.constant 0 : index
    %30 = vector.load %arg1[%c4, %c0_15, %c0_16] : memref<9x16x32xf32, #tpu.memory_space<vmem>>, vector<1x16x32xf32>
    %31 = vector.shape_cast %30 : vector<1x16x32xf32> to vector<16x32xf32>
    %32 = arith.maximumf %24, %31 : vector<16x32xf32>
    %cst_17 = arith.constant -1.000000e+30 : f32
    %33 = vector.broadcast %cst_17 : f32 to vector<16x32xf32>
    %34 = arith.cmpf ogt, %31, %33 : vector<16x32xf32>
    %cst_18 = arith.constant 0.000000e+00 : f32
    %35 = vector.broadcast %cst_18 : f32 to vector<16x32xf32>
    %36 = arith.select %34, %31, %35 : vector<16x32xi1>, vector<16x32xf32>
    %37 = arith.addf %29, %36 : vector<16x32xf32>
    %c5 = arith.constant 5 : index
    %c0_19 = arith.constant 0 : index
    %c0_20 = arith.constant 0 : index
    %38 = vector.load %arg1[%c5, %c0_19, %c0_20] : memref<9x16x32xf32, #tpu.memory_space<vmem>>, vector<1x16x32xf32>
    %39 = vector.shape_cast %38 : vector<1x16x32xf32> to vector<16x32xf32>
    %40 = arith.maximumf %32, %39 : vector<16x32xf32>
    %cst_21 = arith.constant -1.000000e+30 : f32
    %41 = vector.broadcast %cst_21 : f32 to vector<16x32xf32>
    %42 = arith.cmpf ogt, %39, %41 : vector<16x32xf32>
    %cst_22 = arith.constant 0.000000e+00 : f32
    %43 = vector.broadcast %cst_22 : f32 to vector<16x32xf32>
    %44 = arith.select %42, %39, %43 : vector<16x32xi1>, vector<16x32xf32>
    %45 = arith.addf %37, %44 : vector<16x32xf32>
    %c6 = arith.constant 6 : index
    %c0_23 = arith.constant 0 : index
    %c0_24 = arith.constant 0 : index
    %46 = vector.load %arg1[%c6, %c0_23, %c0_24] : memref<9x16x32xf32, #tpu.memory_space<vmem>>, vector<1x16x32xf32>
    %47 = vector.shape_cast %46 : vector<1x16x32xf32> to vector<16x32xf32>
    %48 = arith.maximumf %40, %47 : vector<16x32xf32>
    %cst_25 = arith.constant -1.000000e+30 : f32
    %49 = vector.broadcast %cst_25 : f32 to vector<16x32xf32>
    %50 = arith.cmpf ogt, %47, %49 : vector<16x32xf32>
    %cst_26 = arith.constant 0.000000e+00 : f32
    %51 = vector.broadcast %cst_26 : f32 to vector<16x32xf32>
    %52 = arith.select %50, %47, %51 : vector<16x32xi1>, vector<16x32xf32>
    %53 = arith.addf %45, %52 : vector<16x32xf32>
    %c7 = arith.constant 7 : index
    %c0_27 = arith.constant 0 : index
    %c0_28 = arith.constant 0 : index
    %54 = vector.load %arg1[%c7, %c0_27, %c0_28] : memref<9x16x32xf32, #tpu.memory_space<vmem>>, vector<1x16x32xf32>
    %55 = vector.shape_cast %54 : vector<1x16x32xf32> to vector<16x32xf32>
    %56 = arith.maximumf %48, %55 : vector<16x32xf32>
    %cst_29 = arith.constant -1.000000e+30 : f32
    %57 = vector.broadcast %cst_29 : f32 to vector<16x32xf32>
    %58 = arith.cmpf ogt, %55, %57 : vector<16x32xf32>
    %cst_30 = arith.constant 0.000000e+00 : f32
    %59 = vector.broadcast %cst_30 : f32 to vector<16x32xf32>
    %60 = arith.select %58, %55, %59 : vector<16x32xi1>, vector<16x32xf32>
    %61 = arith.addf %53, %60 : vector<16x32xf32>
    %c8 = arith.constant 8 : index
    %c0_31 = arith.constant 0 : index
    %c0_32 = arith.constant 0 : index
    %62 = vector.load %arg1[%c8, %c0_31, %c0_32] : memref<9x16x32xf32, #tpu.memory_space<vmem>>, vector<1x16x32xf32>
    %63 = vector.shape_cast %62 : vector<1x16x32xf32> to vector<16x32xf32>
    %64 = arith.maximumf %56, %63 : vector<16x32xf32>
    %cst_33 = arith.constant -1.000000e+30 : f32
    %65 = vector.broadcast %cst_33 : f32 to vector<16x32xf32>
    %66 = arith.cmpf ogt, %63, %65 : vector<16x32xf32>
    %cst_34 = arith.constant 0.000000e+00 : f32
    %67 = vector.broadcast %cst_34 : f32 to vector<16x32xf32>
    %68 = arith.select %66, %63, %67 : vector<16x32xi1>, vector<16x32xf32>
    %69 = arith.addf %61, %68 : vector<16x32xf32>
    %cst_35 = arith.constant 0.111111112 : f32
    %70 = vector.broadcast %cst_35 : f32 to vector<16x32xf32>
    %71 = arith.mulf %69, %70 : vector<16x32xf32>
    %c0_36 = arith.constant 0 : index
    %c0_37 = arith.constant 0 : index
    %72 = vector.load %arg2[%c0_36, %c0_37] : memref<32x32xf32, #tpu.memory_space<vmem>>, vector<16x32xf32>
    tpu.vector_store %arg2[%c0_36, %c0_37], %64 {strides = array<i32>} : memref<32x32xf32, #tpu.memory_space<vmem>>, vector<16x32xf32>,
    %c16 = arith.constant 16 : index
    %c0_38 = arith.constant 0 : index
    %73 = vector.load %arg2[%c16, %c0_38] : memref<32x32xf32, #tpu.memory_space<vmem>>, vector<16x32xf32>
    tpu.vector_store %arg2[%c16, %c0_38], %71 {strides = array<i32>} : memref<32x32xf32, #tpu.memory_space<vmem>>, vector<16x32xf32>,
    return
  }
  func.func @transform_0(%arg0: i32) -> (i32, i32, i32) {
    %c0_i32 = arith.constant 0 : i32
    %c0_i32_0 = arith.constant 0 : i32
    %c0_i32_1 = arith.constant 0 : i32
    return %c0_i32, %c0_i32_0, %arg0 : i32, i32, i32
  }
  func.func @transform_1(%arg0: i32) -> (i32, i32) {
    %c0_i32 = arith.constant 0 : i32
    %c0_i32_0 = arith.constant 0 : i32
    return %c0_i32, %arg0 : i32, i32
  }
}

module attributes {stable_mosaic.version = 11 : i64} {
  func.func @_conv_kernel(%arg0: i32, %arg1: memref<288x32xf32, #tpu.memory_space<vmem>>, %arg2: memref<16x288xf32, #tpu.memory_space<vmem>>, %arg3: memref<16x1xf32, #tpu.memory_space<vmem>>, %arg4: memref<16x32xf32, #tpu.memory_space<vmem>>) attributes {dimension_semantics = [#tpu.dimension_semantics<parallel>], iteration_bounds = array<i64: 1>, scalar_prefetch = 0 : i64, scratch_operands = 0 : i64, tpu.core_type = #tpu.core_type<tc>, window_params = [{transform_indices = @transform_0, window_bounds = array<i64: 288, 32>}, {pipeline_mode = #tpu.pipeline_mode<synchronous>, transform_indices = @transform_1, window_bounds = array<i64: 16, 288>}, {pipeline_mode = #tpu.pipeline_mode<synchronous>, transform_indices = @transform_2, window_bounds = array<i64: 16, 1>}, {transform_indices = @transform_3, window_bounds = array<i64: 16, 32>}]} {
    %c0 = arith.constant 0 : index
    %c0_0 = arith.constant 0 : index
    %0 = vector.load %arg2[%c0, %c0_0] : memref<16x288xf32, #tpu.memory_space<vmem>>, vector<16x288xf32>
    %c0_1 = arith.constant 0 : index
    %c0_2 = arith.constant 0 : index
    %1 = vector.load %arg1[%c0_1, %c0_2] : memref<288x32xf32, #tpu.memory_space<vmem>>, vector<288x32xf32>
    %cst = arith.constant dense<0.000000e+00> : vector<16x32xf32>
    %2 = tpu.matmul %0, %1, %cst {dimension_numbers = #tpu.dot_dimension_numbers<[1], [0], [0], [1], [0, 0, 1, 1], [], []>} : vector<16x288xf32>, vector<288x32xf32>, vector<16x32xf32> -> vector<16x32xf32>
    %c0_3 = arith.constant 0 : index
    %c0_4 = arith.constant 0 : index
    %3 = vector.load %arg3[%c0_3, %c0_4] : memref<16x1xf32, #tpu.memory_space<vmem>>, vector<16x1xf32>
    %4 = vector.broadcast %3 : vector<16x1xf32> to vector<16x32xf32>
    %5 = arith.addf %2, %4 : vector<16x32xf32>
    %cst_5 = arith.constant 0.000000e+00 : f32
    %6 = vector.broadcast %cst_5 : f32 to vector<16x32xf32>
    %7 = arith.cmpf oge, %5, %6 : vector<16x32xf32>
    %cst_6 = arith.constant 1.000000e-01 : f32
    %8 = vector.broadcast %cst_6 : f32 to vector<16x32xf32>
    %9 = arith.mulf %8, %5 : vector<16x32xf32>
    %10 = arith.select %7, %5, %9 : vector<16x32xi1>, vector<16x32xf32>
    %c0_7 = arith.constant 0 : index
    %c0_8 = arith.constant 0 : index
    %11 = vector.load %arg4[%c0_7, %c0_8] : memref<16x32xf32, #tpu.memory_space<vmem>>, vector<16x32xf32>
    tpu.vector_store %arg4[%c0_7, %c0_8], %10 {strides = array<i32>} : memref<16x32xf32, #tpu.memory_space<vmem>>, vector<16x32xf32>,
    return
  }
  func.func @transform_0(%arg0: i32) -> (i32, i32) {
    %c0_i32 = arith.constant 0 : i32
    %c0_i32_0 = arith.constant 0 : i32
    return %c0_i32, %arg0 : i32, i32
  }
  func.func @transform_1(%arg0: i32) -> (i32, i32) {
    %c0_i32 = arith.constant 0 : i32
    %c0_i32_0 = arith.constant 0 : i32
    %c0_i32_1 = arith.constant 0 : i32
    return %c0_i32, %c0_i32_0 : i32, i32
  }
  func.func @transform_2(%arg0: i32) -> (i32, i32) {
    %c0_i32 = arith.constant 0 : i32
    %c0_i32_0 = arith.constant 0 : i32
    %c0_i32_1 = arith.constant 0 : i32
    return %c0_i32, %c0_i32_0 : i32, i32
  }
  func.func @transform_3(%arg0: i32) -> (i32, i32) {
    %c0_i32 = arith.constant 0 : i32
    %c0_i32_0 = arith.constant 0 : i32
    return %c0_i32, %arg0 : i32, i32
  }
}

module attributes {stable_mosaic.version = 11 : i64} {
  func.func @_conv_kernel(%arg0: i32, %arg1: memref<144x32xf32, #tpu.memory_space<vmem>>, %arg2: memref<16x144xf32, #tpu.memory_space<vmem>>, %arg3: memref<16x1xf32, #tpu.memory_space<vmem>>, %arg4: memref<16x32xf32, #tpu.memory_space<vmem>>) attributes {dimension_semantics = [#tpu.dimension_semantics<parallel>], iteration_bounds = array<i64: 1>, scalar_prefetch = 0 : i64, scratch_operands = 0 : i64, tpu.core_type = #tpu.core_type<tc>, window_params = [{transform_indices = @transform_0, window_bounds = array<i64: 144, 32>}, {pipeline_mode = #tpu.pipeline_mode<synchronous>, transform_indices = @transform_1, window_bounds = array<i64: 16, 144>}, {pipeline_mode = #tpu.pipeline_mode<synchronous>, transform_indices = @transform_2, window_bounds = array<i64: 16, 1>}, {transform_indices = @transform_3, window_bounds = array<i64: 16, 32>}]} {
    %c0 = arith.constant 0 : index
    %c0_0 = arith.constant 0 : index
    %0 = vector.load %arg2[%c0, %c0_0] : memref<16x144xf32, #tpu.memory_space<vmem>>, vector<16x144xf32>
    %c0_1 = arith.constant 0 : index
    %c0_2 = arith.constant 0 : index
    %1 = vector.load %arg1[%c0_1, %c0_2] : memref<144x32xf32, #tpu.memory_space<vmem>>, vector<144x32xf32>
    %cst = arith.constant dense<0.000000e+00> : vector<16x32xf32>
    %2 = tpu.matmul %0, %1, %cst {dimension_numbers = #tpu.dot_dimension_numbers<[1], [0], [0], [1], [0, 0, 1, 1], [], []>} : vector<16x144xf32>, vector<144x32xf32>, vector<16x32xf32> -> vector<16x32xf32>
    %c0_3 = arith.constant 0 : index
    %c0_4 = arith.constant 0 : index
    %3 = vector.load %arg3[%c0_3, %c0_4] : memref<16x1xf32, #tpu.memory_space<vmem>>, vector<16x1xf32>
    %4 = vector.broadcast %3 : vector<16x1xf32> to vector<16x32xf32>
    %5 = arith.addf %2, %4 : vector<16x32xf32>
    %cst_5 = arith.constant 0.000000e+00 : f32
    %6 = vector.broadcast %cst_5 : f32 to vector<16x32xf32>
    %7 = arith.cmpf oge, %5, %6 : vector<16x32xf32>
    %cst_6 = arith.constant 1.000000e-01 : f32
    %8 = vector.broadcast %cst_6 : f32 to vector<16x32xf32>
    %9 = arith.mulf %8, %5 : vector<16x32xf32>
    %10 = arith.select %7, %5, %9 : vector<16x32xi1>, vector<16x32xf32>
    %c0_7 = arith.constant 0 : index
    %c0_8 = arith.constant 0 : index
    %11 = vector.load %arg4[%c0_7, %c0_8] : memref<16x32xf32, #tpu.memory_space<vmem>>, vector<16x32xf32>
    tpu.vector_store %arg4[%c0_7, %c0_8], %10 {strides = array<i32>} : memref<16x32xf32, #tpu.memory_space<vmem>>, vector<16x32xf32>,
    return
  }
  func.func @transform_0(%arg0: i32) -> (i32, i32) {
    %c0_i32 = arith.constant 0 : i32
    %c0_i32_0 = arith.constant 0 : i32
    return %c0_i32, %arg0 : i32, i32
  }
  func.func @transform_1(%arg0: i32) -> (i32, i32) {
    %c0_i32 = arith.constant 0 : i32
    %c0_i32_0 = arith.constant 0 : i32
    %c0_i32_1 = arith.constant 0 : i32
    return %c0_i32, %c0_i32_0 : i32, i32
  }
  func.func @transform_2(%arg0: i32) -> (i32, i32) {
    %c0_i32 = arith.constant 0 : i32
    %c0_i32_0 = arith.constant 0 : i32
    %c0_i32_1 = arith.constant 0 : i32
    return %c0_i32, %c0_i32_0 : i32, i32
  }
  func.func @transform_3(%arg0: i32) -> (i32, i32) {
    %c0_i32 = arith.constant 0 : i32
    %c0_i32_0 = arith.constant 0 : i32
    return %c0_i32, %arg0 : i32, i32
  }
}

module attributes {stable_mosaic.version = 11 : i64} {
  func.func @_attn34_kernel(%arg0: i32, %arg1: memref<144x128xf32, #tpu.memory_space<vmem>>, %arg2: memref<16x128xf32, #tpu.memory_space<vmem>>, %arg3: memref<16x144xf32, #tpu.memory_space<vmem>>, %arg4: memref<16x1xf32, #tpu.memory_space<vmem>>, %arg5: memref<16x16xf32, #tpu.memory_space<vmem>>, %arg6: memref<16x1xf32, #tpu.memory_space<vmem>>, %arg7: memref<16x128xf32, #tpu.memory_space<vmem>>) attributes {dimension_semantics = [#tpu.dimension_semantics<parallel>], iteration_bounds = array<i64: 1>, scalar_prefetch = 0 : i64, scratch_operands = 0 : i64, tpu.core_type = #tpu.core_type<tc>, window_params = [{transform_indices = @transform_0, window_bounds = array<i64: 144, 128>}, {transform_indices = @transform_1, window_bounds = array<i64: 16, 128>}, {pipeline_mode = #tpu.pipeline_mode<synchronous>, transform_indices = @transform_2, window_bounds = array<i64: 16, 144>}, {pipeline_mode = #tpu.pipeline_mode<synchronous>, transform_indices = @transform_3, window_bounds = array<i64: 16, 1>}, {pipeline_mode = #tpu.pipeline_mode<synchronous>, transform_indices = @transform_4, window_bounds = array<i64: 16, 16>}, {pipeline_mode = #tpu.pipeline_mode<synchronous>, transform_indices = @transform_5, window_bounds = array<i64: 16, 1>}, {transform_indices = @transform_6, window_bounds = array<i64: 16, 128>}]} {
    %c0 = arith.constant 0 : index
    %c0_0 = arith.constant 0 : index
    %0 = vector.load %arg3[%c0, %c0_0] : memref<16x144xf32, #tpu.memory_space<vmem>>, vector<16x144xf32>
    %c0_1 = arith.constant 0 : index
    %c0_2 = arith.constant 0 : index
    %1 = vector.load %arg1[%c0_1, %c0_2] : memref<144x128xf32, #tpu.memory_space<vmem>>, vector<144x128xf32>
    %cst = arith.constant dense<0.000000e+00> : vector<16x128xf32>
    %2 = tpu.matmul %0, %1, %cst {dimension_numbers = #tpu.dot_dimension_numbers<[1], [0], [0], [1], [0, 0, 1, 1], [], []>} : vector<16x144xf32>, vector<144x128xf32>, vector<16x128xf32> -> vector<16x128xf32>
    %c0_3 = arith.constant 0 : index
    %c0_4 = arith.constant 0 : index
    %3 = vector.load %arg4[%c0_3, %c0_4] : memref<16x1xf32, #tpu.memory_space<vmem>>, vector<16x1xf32>
    %4 = vector.broadcast %3 : vector<16x1xf32> to vector<16x128xf32>
    %5 = arith.addf %2, %4 : vector<16x128xf32>
    %cst_5 = arith.constant 0.000000e+00 : f32
    %6 = vector.broadcast %cst_5 : f32 to vector<16x128xf32>
    %7 = arith.cmpf oge, %5, %6 : vector<16x128xf32>
    %cst_6 = arith.constant 1.000000e-01 : f32
    %8 = vector.broadcast %cst_6 : f32 to vector<16x128xf32>
    %9 = arith.mulf %8, %5 : vector<16x128xf32>
    %10 = arith.select %7, %5, %9 : vector<16x128xi1>, vector<16x128xf32>
    %c0_7 = arith.constant 0 : index
    %c0_8 = arith.constant 0 : index
    %11 = vector.load %arg2[%c0_7, %c0_8] : memref<16x128xf32, #tpu.memory_space<vmem>>, vector<16x128xf32>
    %12 = arith.addf %10, %11 : vector<16x128xf32>
    %c0_9 = arith.constant 0 : index
    %c0_10 = arith.constant 0 : index
    %13 = vector.load %arg5[%c0_9, %c0_10] : memref<16x16xf32, #tpu.memory_space<vmem>>, vector<16x16xf32>
    %cst_11 = arith.constant dense<0.000000e+00> : vector<16x128xf32>
    %14 = tpu.matmul %13, %12, %cst_11 {dimension_numbers = #tpu.dot_dimension_numbers<[1], [0], [0], [1], [0, 0, 1, 1], [], []>} : vector<16x16xf32>, vector<16x128xf32>, vector<16x128xf32> -> vector<16x128xf32>
    %c0_12 = arith.constant 0 : index
    %c0_13 = arith.constant 0 : index
    %15 = vector.load %arg6[%c0_12, %c0_13] : memref<16x1xf32, #tpu.memory_space<vmem>>, vector<16x1xf32>
    %16 = vector.broadcast %15 : vector<16x1xf32> to vector<16x128xf32>
    %17 = arith.addf %14, %16 : vector<16x128xf32>
    %cst_14 = arith.constant 0.000000e+00 : f32
    %18 = vector.broadcast %cst_14 : f32 to vector<16x128xf32>
    %19 = arith.cmpf oge, %17, %18 : vector<16x128xf32>
    %cst_15 = arith.constant 1.000000e-01 : f32
    %20 = vector.broadcast %cst_15 : f32 to vector<16x128xf32>
    %21 = arith.mulf %20, %17 : vector<16x128xf32>
    %22 = arith.select %19, %17, %21 : vector<16x128xi1>, vector<16x128xf32>
    %c0_16 = arith.constant 0 : index
    %c0_17 = arith.constant 0 : index
    %23 = vector.load %arg7[%c0_16, %c0_17] : memref<16x128xf32, #tpu.memory_space<vmem>>, vector<16x128xf32>
    tpu.vector_store %arg7[%c0_16, %c0_17], %22 {strides = array<i32>} : memref<16x128xf32, #tpu.memory_space<vmem>>, vector<16x128xf32>,
    return
  }
  func.func @transform_0(%arg0: i32) -> (i32, i32) {
    %c0_i32 = arith.constant 0 : i32
    %c0_i32_0 = arith.constant 0 : i32
    return %c0_i32, %arg0 : i32, i32
  }
  func.func @transform_1(%arg0: i32) -> (i32, i32) {
    %c0_i32 = arith.constant 0 : i32
    %c0_i32_0 = arith.constant 0 : i32
    return %c0_i32, %arg0 : i32, i32
  }
  func.func @transform_2(%arg0: i32) -> (i32, i32) {
    %c0_i32 = arith.constant 0 : i32
    %c0_i32_0 = arith.constant 0 : i32
    %c0_i32_1 = arith.constant 0 : i32
    return %c0_i32, %c0_i32_0 : i32, i32
  }
  func.func @transform_3(%arg0: i32) -> (i32, i32) {
    %c0_i32 = arith.constant 0 : i32
    %c0_i32_0 = arith.constant 0 : i32
    %c0_i32_1 = arith.constant 0 : i32
    return %c0_i32, %c0_i32_0 : i32, i32
  }
  func.func @transform_4(%arg0: i32) -> (i32, i32) {
    %c0_i32 = arith.constant 0 : i32
    %c0_i32_0 = arith.constant 0 : i32
    %c0_i32_1 = arith.constant 0 : i32
    return %c0_i32, %c0_i32_0 : i32, i32
  }
  func.func @transform_5(%arg0: i32) -> (i32, i32) {
    %c0_i32 = arith.constant 0 : i32
    %c0_i32_0 = arith.constant 0 : i32
    %c0_i32_1 = arith.constant 0 : i32
    return %c0_i32, %c0_i32_0 : i32, i32
  }
  func.func @transform_6(%arg0: i32) -> (i32, i32) {
    %c0_i32 = arith.constant 0 : i32
    %c0_i32_0 = arith.constant 0 : i32
    return %c0_i32, %arg0 : i32, i32
  }
}

module attributes {stable_mosaic.version = 11 : i64} {
  func.func @_attn5_tail_kernel(%arg0: i32, %arg1: memref<144x512xf32, #tpu.memory_space<vmem>>, %arg2: memref<16x512xf32, #tpu.memory_space<vmem>>, %arg3: memref<16x144xf32, #tpu.memory_space<vmem>>, %arg4: memref<16x1xf32, #tpu.memory_space<vmem>>, %arg5: memref<16x16xf32, #tpu.memory_space<vmem>>, %arg6: memref<16x1xf32, #tpu.memory_space<vmem>>, %arg7: memref<16x16xf32, #tpu.memory_space<vmem>>, %arg8: memref<16x1xf32, #tpu.memory_space<vmem>>, %arg9: memref<16x512xf32, #tpu.memory_space<vmem>>) attributes {dimension_semantics = [#tpu.dimension_semantics<parallel>], iteration_bounds = array<i64: 1>, scalar_prefetch = 0 : i64, scratch_operands = 0 : i64, tpu.core_type = #tpu.core_type<tc>, window_params = [{transform_indices = @transform_0, window_bounds = array<i64: 144, 512>}, {transform_indices = @transform_1, window_bounds = array<i64: 16, 512>}, {pipeline_mode = #tpu.pipeline_mode<synchronous>, transform_indices = @transform_2, window_bounds = array<i64: 16, 144>}, {pipeline_mode = #tpu.pipeline_mode<synchronous>, transform_indices = @transform_3, window_bounds = array<i64: 16, 1>}, {pipeline_mode = #tpu.pipeline_mode<synchronous>, transform_indices = @transform_4, window_bounds = array<i64: 16, 16>}, {pipeline_mode = #tpu.pipeline_mode<synchronous>, transform_indices = @transform_5, window_bounds = array<i64: 16, 1>}, {pipeline_mode = #tpu.pipeline_mode<synchronous>, transform_indices = @transform_6, window_bounds = array<i64: 16, 16>}, {pipeline_mode = #tpu.pipeline_mode<synchronous>, transform_indices = @transform_7, window_bounds = array<i64: 16, 1>}, {transform_indices = @transform_8, window_bounds = array<i64: 16, 512>}]} {
    %c0 = arith.constant 0 : index
    %c0_0 = arith.constant 0 : index
    %0 = vector.load %arg3[%c0, %c0_0] : memref<16x144xf32, #tpu.memory_space<vmem>>, vector<16x144xf32>
    %c0_1 = arith.constant 0 : index
    %c0_2 = arith.constant 0 : index
    %1 = vector.load %arg1[%c0_1, %c0_2] : memref<144x512xf32, #tpu.memory_space<vmem>>, vector<144x512xf32>
    %cst = arith.constant dense<0.000000e+00> : vector<16x512xf32>
    %2 = tpu.matmul %0, %1, %cst {dimension_numbers = #tpu.dot_dimension_numbers<[1], [0], [0], [1], [0, 0, 1, 1], [], []>} : vector<16x144xf32>, vector<144x512xf32>, vector<16x512xf32> -> vector<16x512xf32>
    %c0_3 = arith.constant 0 : index
    %c0_4 = arith.constant 0 : index
    %3 = vector.load %arg4[%c0_3, %c0_4] : memref<16x1xf32, #tpu.memory_space<vmem>>, vector<16x1xf32>
    %4 = vector.broadcast %3 : vector<16x1xf32> to vector<16x512xf32>
    %5 = arith.addf %2, %4 : vector<16x512xf32>
    %c0_5 = arith.constant 0 : index
    %c0_6 = arith.constant 0 : index
    %6 = vector.load %arg5[%c0_5, %c0_6] : memref<16x16xf32, #tpu.memory_space<vmem>>, vector<16x16xf32>
    %cst_7 = arith.constant dense<0.000000e+00> : vector<16x512xf32>
    %7 = tpu.matmul %6, %5, %cst_7 {dimension_numbers = #tpu.dot_dimension_numbers<[1], [0], [0], [1], [0, 0, 1, 1], [], []>} : vector<16x16xf32>, vector<16x512xf32>, vector<16x512xf32> -> vector<16x512xf32>
    %c0_8 = arith.constant 0 : index
    %c0_9 = arith.constant 0 : index
    %8 = vector.load %arg6[%c0_8, %c0_9] : memref<16x1xf32, #tpu.memory_space<vmem>>, vector<16x1xf32>
    %9 = vector.broadcast %8 : vector<16x1xf32> to vector<16x512xf32>
    %10 = arith.addf %7, %9 : vector<16x512xf32>
    %cst_10 = arith.constant 0.000000e+00 : f32
    %11 = vector.broadcast %cst_10 : f32 to vector<16x512xf32>
    %12 = arith.cmpf oge, %10, %11 : vector<16x512xf32>
    %cst_11 = arith.constant 1.000000e-01 : f32
    %13 = vector.broadcast %cst_11 : f32 to vector<16x512xf32>
    %14 = arith.mulf %13, %10 : vector<16x512xf32>
    %15 = arith.select %12, %10, %14 : vector<16x512xi1>, vector<16x512xf32>
    %c0_12 = arith.constant 0 : index
    %c0_13 = arith.constant 0 : index
    %16 = vector.load %arg7[%c0_12, %c0_13] : memref<16x16xf32, #tpu.memory_space<vmem>>, vector<16x16xf32>
    %cst_14 = arith.constant dense<0.000000e+00> : vector<16x512xf32>
    %17 = tpu.matmul %16, %15, %cst_14 {dimension_numbers = #tpu.dot_dimension_numbers<[1], [0], [0], [1], [0, 0, 1, 1], [], []>} : vector<16x16xf32>, vector<16x512xf32>, vector<16x512xf32> -> vector<16x512xf32>
    %c0_15 = arith.constant 0 : index
    %c0_16 = arith.constant 0 : index
    %18 = vector.load %arg8[%c0_15, %c0_16] : memref<16x1xf32, #tpu.memory_space<vmem>>, vector<16x1xf32>
    %19 = vector.broadcast %18 : vector<16x1xf32> to vector<16x512xf32>
    %20 = arith.addf %17, %19 : vector<16x512xf32>
    %c0_17 = arith.constant 0 : index
    %c0_18 = arith.constant 0 : index
    %21 = vector.load %arg2[%c0_17, %c0_18] : memref<16x512xf32, #tpu.memory_space<vmem>>, vector<16x512xf32>
    %22 = arith.negf %5 : vector<16x512xf32>
    %23 = math.exp %22 : vector<16x512xf32>
    %cst_19 = arith.constant 1.000000e+00 : f32
    %24 = vector.broadcast %cst_19 : f32 to vector<16x512xf32>
    %25 = arith.addf %24, %23 : vector<16x512xf32>
    %26 = arith.divf %24, %25 : vector<16x512xf32>
    %27 = arith.mulf %21, %26 : vector<16x512xf32>
    %cst_20 = arith.constant 2.000000e+00 : f32
    %28 = vector.broadcast %cst_20 : f32 to vector<16x512xf32>
    %29 = arith.mulf %27, %28 : vector<16x512xf32>
    %30 = arith.addf %29, %20 : vector<16x512xf32>
    %c0_21 = arith.constant 0 : index
    %c0_22 = arith.constant 0 : index
    %31 = vector.load %arg9[%c0_21, %c0_22] : memref<16x512xf32, #tpu.memory_space<vmem>>, vector<16x512xf32>
    tpu.vector_store %arg9[%c0_21, %c0_22], %30 {strides = array<i32>} : memref<16x512xf32, #tpu.memory_space<vmem>>, vector<16x512xf32>,
    return
  }
  func.func @transform_0(%arg0: i32) -> (i32, i32) {
    %c0_i32 = arith.constant 0 : i32
    %c0_i32_0 = arith.constant 0 : i32
    return %c0_i32, %arg0 : i32, i32
  }
  func.func @transform_1(%arg0: i32) -> (i32, i32) {
    %c0_i32 = arith.constant 0 : i32
    %c0_i32_0 = arith.constant 0 : i32
    return %c0_i32, %arg0 : i32, i32
  }
  func.func @transform_2(%arg0: i32) -> (i32, i32) {
    %c0_i32 = arith.constant 0 : i32
    %c0_i32_0 = arith.constant 0 : i32
    %c0_i32_1 = arith.constant 0 : i32
    return %c0_i32, %c0_i32_0 : i32, i32
  }
  func.func @transform_3(%arg0: i32) -> (i32, i32) {
    %c0_i32 = arith.constant 0 : i32
    %c0_i32_0 = arith.constant 0 : i32
    %c0_i32_1 = arith.constant 0 : i32
    return %c0_i32, %c0_i32_0 : i32, i32
  }
  func.func @transform_4(%arg0: i32) -> (i32, i32) {
    %c0_i32 = arith.constant 0 : i32
    %c0_i32_0 = arith.constant 0 : i32
    %c0_i32_1 = arith.constant 0 : i32
    return %c0_i32, %c0_i32_0 : i32, i32
  }
  func.func @transform_5(%arg0: i32) -> (i32, i32) {
    %c0_i32 = arith.constant 0 : i32
    %c0_i32_0 = arith.constant 0 : i32
    %c0_i32_1 = arith.constant 0 : i32
    return %c0_i32, %c0_i32_0 : i32, i32
  }
  func.func @transform_6(%arg0: i32) -> (i32, i32) {
    %c0_i32 = arith.constant 0 : i32
    %c0_i32_0 = arith.constant 0 : i32
    %c0_i32_1 = arith.constant 0 : i32
    return %c0_i32, %c0_i32_0 : i32, i32
  }
  func.func @transform_7(%arg0: i32) -> (i32, i32) {
    %c0_i32 = arith.constant 0 : i32
    %c0_i32_0 = arith.constant 0 : i32
    %c0_i32_1 = arith.constant 0 : i32
    return %c0_i32, %c0_i32_0 : i32, i32
  }
  func.func @transform_8(%arg0: i32) -> (i32, i32) {
    %c0_i32 = arith.constant 0 : i32
    %c0_i32_0 = arith.constant 0 : i32
    return %c0_i32, %arg0 : i32, i32
  }
}

</mosaic_0001>

<llo_original>
// kernel: spatial_attention_forward.7
$region0: #{spatial_attention_forward.7}
  #allocation0 [shape = 'u32[]', space=smem, size = 0x4, offset = 0x4, fixed_abs, tag = 'smem constant byte address 0x4 - core index']
  #allocation1 [shape = 'u32[72,128]{1,0:T(1,128)}', space=vmem, size = 0x9000, scoped, tag = 'internal scratch']
  %s0 = inlined_call_operand.vmem [shape: f32[48,512], index: 0, kind: input, shape index: {}]
  %s1 = inlined_call_operand.vmem [shape: f32[16,48], index: 1, kind: input, shape index: {}]
  %s2 = inlined_call_operand.vmem [shape: f32[16,1], index: 2, kind: input, shape index: {}]
  %s3 = inlined_call_operand.vmem [shape: f32[16,512], index: 3, kind: output, shape index: {}]
  %s4 = sld [smem:[#allocation0]]
  $region22: #{spatial_attention_forward.7} parent=0
    _
  %s6 = ssub.s32 1, %s4
  %s7 = scalar_select 0, %s6, %s4
  // Predicated region
  $region2: #{spatial_attention_forward.7} parent=0 // pred_check
    _
  $region3: #{spatial_attention_forward.7} parent=0 // pred_check_branch
    %9 = sbr.rel (0) target = $region5
  $region4: #{spatial_attention_forward.7} parent=0 // pred_region
    _
  $region5: #{spatial_attention_forward.7} parent=0 // pred_fallthru
    _
  // Predicated region
  $region6: #{spatial_attention_forward.7} parent=0 // pred_check
    _
  $region7: #{spatial_attention_forward.7} parent=0 // pred_check_branch
    %11 = sbr.rel (0) target = $region9
  $region8: #{spatial_attention_forward.7} parent=0 // pred_region
    _
  $region9: #{spatial_attention_forward.7} parent=0 // pred_fallthru
    _
  // Predicated region
  $region10: #{spatial_attention_forward.7} parent=0 // pred_check
    _
  $region11: #{spatial_attention_forward.7} parent=0 // pred_check_branch
    %13 = sbr.rel (0) target = $region13
  $region12: #{spatial_attention_forward.7} parent=0 // pred_region
    _
  $region13: #{spatial_attention_forward.7} parent=0 // pred_fallthru
    _
  %v14 = vld [vmem:[%s1] sm:$0xff]
  %v15 = vld [vmem:[%s1 + $0x8] sm:$0xff]
  %v16 = vld [vmem:[%s0] sm:$0xff]
  %v17 = vld [vmem:[%s0 + $0x8] sm:$0xff]
  %v18 = vld [vmem:[%s0 + $0x10] sm:$0xff]
  %v19 = vld [vmem:[%s0 + $0x18] sm:$0xff]
  %v20 = vld [vmem:[%s0 + $0x20] sm:$0xff]
  %v21 = vld [vmem:[%s0 + $0x28] sm:$0xff]
  %v22 = vld [vmem:[%s0 + $0x30] sm:$0xff]
  %v23 = vld [vmem:[%s0 + $0x38] sm:$0xff]
  %v24 = vld [vmem:[%s0 + $0x40] sm:$0xff]
  %v25 = vld [vmem:[%s0 + $0x48] sm:$0xff]
  %v26 = vld [vmem:[%s0 + $0x50] sm:$0xff]
  %v27 = vld [vmem:[%s0 + $0x58] sm:$0xff]
  %v28 = vld [vmem:[%s0 + $0x60] sm:$0xff]
  %v29 = vld [vmem:[%s0 + $0x68] sm:$0xff]
  %v30 = vld [vmem:[%s0 + $0x70] sm:$0xff]
  %v31 = vld [vmem:[%s0 + $0x78] sm:$0xff]
  %v32 = vld [vmem:[%s0 + $0x80] sm:$0xff]
  %v33 = vld [vmem:[%s0 + $0x88] sm:$0xff]
  %v34 = vld [vmem:[%s0 + $0x90] sm:$0xff]
  %v35 = vld [vmem:[%s0 + $0x98] sm:$0xff]
  %v36 = vld [vmem:[%s0 + $0xa0] sm:$0xff]
  %v37 = vld [vmem:[%s0 + $0xa8] sm:$0xff]
  %v38 = vld [vmem:[%s0 + $0xb0] sm:$0xff]
  %v39 = vld [vmem:[%s0 + $0xb8] sm:$0xff]
  %v40 = vld [vmem:[%s2] sm:$0xff]
  %v41 = vld [vmem:[%s2 + $0x8] sm:$0xff]
  %43 = vset.pattern.permute.xlu0 0
  %44 = vperm.xlu0 %43, %v40
  %v45 = vpop.permute.xlu0 %44
  %48 = vset.pattern.permute.xlu0 0
  %49 = vperm.xlu0 %48, %v41
  %v50 = vpop.permute.xlu0 %49
  %vm52 = vcmask 392192
  %v54 = vsel %vm52, %v14, 0
  %v57 = vsel %vm52, %v15, 0
  %59 = vmatpush.msra.mxu0 0.0
  %60 = vmatpush.msra.mxu0 0.0
  %61 = vmatpush.msra.mxu0 0.0
  %62 = vmatpush.msra.mxu0 0.0
  %63 = vmatpush.msra.mxu0 0.0
  %64 = vmatpush.msra.mxu0 0.0
  %65 = vmatpush.msra.mxu0 0.0
  %66 = vmatpush.msra.mxu0 0.0
  %67 = vmatpush.msra.mxu0 0.0
  %68 = vmatpush.msra.mxu0 0.0
  %69 = vmatpush.msra.mxu0 %v36
  %70 = vmatpush.msra.mxu0 %v32
  %71 = vmatpush.msra.mxu0 %v28
  %72 = vmatpush.msra.mxu0 %v24
  %73 = vmatpush.msra.mxu0 %v20
  %74 = vmatpush.msra.mxu0 %v16
  %75 = vmatmul.f32.gmra.mxu0 %v54
  %v76 = vpop.f32.mrf.mxu0
  %v77 = vadd.f32 %v45, %v76
  %78 = vmatmul.f32.gmra.mxu0 %v57
  %v79 = vpop.f32.mrf.mxu0
  %v80 = vadd.f32 %v50, %v79
  %81 = vdwg.mxu0
  %82 = vmatpush.msra.mxu0 0.0
  %83 = vmatpush.msra.mxu0 0.0
  %84 = vmatpush.msra.mxu0 0.0
  %85 = vmatpush.msra.mxu0 0.0
  %86 = vmatpush.msra.mxu0 0.0
  %87 = vmatpush.msra.mxu0 0.0
  %88 = vmatpush.msra.mxu0 0.0
  %89 = vmatpush.msra.mxu0 0.0
  %90 = vmatpush.msra.mxu0 0.0
  %91 = vmatpush.msra.mxu0 0.0
  %92 = vmatpush.msra.mxu0 %v37
  %93 = vmatpush.msra.mxu0 %v33
  %94 = vmatpush.msra.mxu0 %v29
  %95 = vmatpush.msra.mxu0 %v25
  %96 = vmatpush.msra.mxu0 %v21
  %97 = vmatpush.msra.mxu0 %v17
  %98 = vmatmul.f32.gmra.mxu0 %v54
  %v99 = vpop.f32.mrf.mxu0
  %v100 = vadd.f32 %v45, %v99
  %101 = vmatmul.f32.gmra.mxu0 %v57
  %v102 = vpop.f32.mrf.mxu0
  %v103 = vadd.f32 %v50, %v102
  %104 = vdwg.mxu0
  %105 = vmatpush.msra.mxu0 0.0
  %106 = vmatpush.msra.mxu0 0.0
  %107 = vmatpush.msra.mxu0 0.0
  %108 = vmatpush.msra.mxu0 0.0
  %109 = vmatpush.msra.mxu0 0.0
  %110 = vmatpush.msra.mxu0 0.0
  %111 = vmatpush.msra.mxu0 0.0
  %112 = vmatpush.msra.mxu0 0.0
  %113 = vmatpush.msra.mxu0 0.0
  %114 = vmatpush.msra.mxu0 0.0
  %115 = vmatpush.msra.mxu0 %v38
  %116 = vmatpush.msra.mxu0 %v34
  %117 = vmatpush.msra.mxu0 %v30
  %118 = vmatpush.msra.mxu0 %v26
  %119 = vmatpush.msra.mxu0 %v22
  %120 = vmatpush.msra.mxu0 %v18
  %121 = vmatmul.f32.gmra.mxu0 %v54
  %v122 = vpop.f32.mrf.mxu0
  %v123 = vadd.f32 %v45, %v122
  %124 = vmatmul.f32.gmra.mxu0 %v57
  %v125 = vpop.f32.mrf.mxu0
  %v126 = vadd.f32 %v50, %v125
  %127 = vdwg.mxu0
  %128 = vmatpush.msra.mxu0 0.0
  %129 = vmatpush.msra.mxu0 0.0
  %130 = vmatpush.msra.mxu0 0.0
  %131 = vmatpush.msra.mxu0 0.0
  %132 = vmatpush.msra.mxu0 0.0
  %133 = vmatpush.msra.mxu0 0.0
  %134 = vmatpush.msra.mxu0 0.0
  %135 = vmatpush.msra.mxu0 0.0
  %136 = vmatpush.msra.mxu0 0.0
  %137 = vmatpush.msra.mxu0 0.0
  %138 = vmatpush.msra.mxu0 %v39
  %139 = vmatpush.msra.mxu0 %v35
  %140 = vmatpush.msra.mxu0 %v31
  %141 = vmatpush.msra.mxu0 %v27
  %142 = vmatpush.msra.mxu0 %v23
  %143 = vmatpush.msra.mxu0 %v19
  %144 = vmatmul.f32.gmra.mxu0 %v54
  %v145 = vpop.f32.mrf.mxu0
  %v146 = vadd.f32 %v45, %v145
  %147 = vmatmul.f32.gmra.mxu0 %v57
  %v148 = vpop.f32.mrf.mxu0
  %v149 = vadd.f32 %v50, %v148
  %150 = vdwg.mxu0
  %vm151 = vcmp.ge.f32.partialorder %v77, 0.0
  %vm152 = vcmp.ge.f32.partialorder %v100, 0.0
  %vm153 = vcmp.ge.f32.partialorder %v123, 0.0
  %vm154 = vcmp.ge.f32.partialorder %v146, 0.0
  %vm155 = vcmp.ge.f32.partialorder %v80, 0.0
  %vm156 = vcmp.ge.f32.partialorder %v103, 0.0
  %vm157 = vcmp.ge.f32.partialorder %v126, 0.0
  %vm158 = vcmp.ge.f32.partialorder %v149, 0.0
  %v159 = vmul.f32 %v77, 0.1
  %v160 = vmul.f32 %v100, 0.1
  %v161 = vmul.f32 %v123, 0.1
  %v162 = vmul.f32 %v146, 0.1
  %v163 = vmul.f32 %v80, 0.1
  %v164 = vmul.f32 %v103, 0.1
  %v165 = vmul.f32 %v126, 0.1
  %v166 = vmul.f32 %v149, 0.1
  %v167 = vsel %vm151, %v77, %v159
  %v168 = vsel %vm152, %v100, %v160
  %v169 = vsel %vm153, %v123, %v161
  %v170 = vsel %vm154, %v146, %v162
  %v171 = vsel %vm155, %v80, %v163
  %v172 = vsel %vm156, %v103, %v164
  %v173 = vsel %vm157, %v126, %v165
  %v174 = vsel %vm158, %v149, %v166
  %175 = vst [vmem:[%s3] sm:$0xff] %v167
  %176 = vst [vmem:[%s3 + $0x8] sm:$0xff] %v168
  %177 = vst [vmem:[%s3 + $0x10] sm:$0xff] %v169
  %178 = vst [vmem:[%s3 + $0x18] sm:$0xff] %v170
  %179 = vst [vmem:[%s3 + $0x20] sm:$0xff] %v171
  %180 = vst [vmem:[%s3 + $0x28] sm:$0xff] %v172
  %181 = vst [vmem:[%s3 + $0x30] sm:$0xff] %v173
  %182 = vst [vmem:[%s3 + $0x38] sm:$0xff] %v174
  // Predicated region
  $region14: #{spatial_attention_forward.7} parent=0 // pred_check
    _
  $region15: #{spatial_attention_forward.7} parent=0 // pred_check_branch
    %184 = sbr.rel (0) target = $region17
  $region16: #{spatial_attention_forward.7} parent=0 // pred_region
    _
  $region17: #{spatial_attention_forward.7} parent=0 // pred_fallthru
    _
  // Predicated region
  $region18: #{spatial_attention_forward.7} parent=0 // pred_check
    _
  $region19: #{spatial_attention_forward.7} parent=0 // pred_check_branch
    %186 = sbr.rel (0) target = $region21
  $region20: #{spatial_attention_forward.7} parent=0 // pred_region
    _
  $region21: #{spatial_attention_forward.7} parent=0 // pred_fallthru
    _

// kernel: spatial_attention_forward.8
$region0: #{spatial_attention_forward.8}
  #allocation0 [shape = 'u32[]', space=smem, size = 0x4, offset = 0x4, fixed_abs, tag = 'smem constant byte address 0x4 - core index']
  #allocation1 [shape = 'u32[72,128]{1,0:T(1,128)}', space=vmem, size = 0x9000, scoped, tag = 'internal scratch']
  %s0 = inlined_call_operand.vmem [shape: f32[9,16,128], index: 0, kind: input, shape index: {}]
  %s1 = inlined_call_operand.vmem [shape: f32[16,32], index: 1, kind: input, shape index: {}]
  %s2 = inlined_call_operand.vmem [shape: f32[16,1], index: 2, kind: input, shape index: {}]
  %s3 = inlined_call_operand.vmem [shape: f32[16,16], index: 3, kind: input, shape index: {}]
  %s4 = inlined_call_operand.vmem [shape: f32[16,1], index: 4, kind: input, shape index: {}]
  %s5 = inlined_call_operand.vmem [shape: f32[16,128], index: 5, kind: output, shape index: {0}]
  %s6 = inlined_call_operand.vmem [shape: f32[16,128], index: 6, kind: output, shape index: {1}]
  %7 = xla_tuple %s5, %s6
  %s8 = sld [smem:[#allocation0]]
  $region38: #{spatial_attention_forward.8} parent=0
    _
  %s10 = ssub.s32 1, %s8
  %s11 = scalar_select 0, %s10, %s8
  // Predicated region
  $region2: #{spatial_attention_forward.8} parent=0 // pred_check
    _
  $region3: #{spatial_attention_forward.8} parent=0 // pred_check_branch
    %13 = sbr.rel (0) target = $region5
  $region4: #{spatial_attention_forward.8} parent=0 // pred_region
    _
  $region5: #{spatial_attention_forward.8} parent=0 // pred_fallthru
    _
  // Predicated region
  $region6: #{spatial_attention_forward.8} parent=0 // pred_check
    _
  $region7: #{spatial_attention_forward.8} parent=0 // pred_check_branch
    %15 = sbr.rel (0) target = $region9
  $region8: #{spatial_attention_forward.8} parent=0 // pred_region
    _
  $region9: #{spatial_attention_forward.8} parent=0 // pred_fallthru
    _
  // Predicated region
  $region10: #{spatial_attention_forward.8} parent=0 // pred_check
    _
  $region11: #{spatial_attention_forward.8} parent=0 // pred_check_branch
    %17 = sbr.rel (0) target = $region13
  $region12: #{spatial_attention_forward.8} parent=0 // pred_region
    _
  $region13: #{spatial_attention_forward.8} parent=0 // pred_fallthru
    _
  // Predicated region
  $region14: #{spatial_attention_forward.8} parent=0 // pred_check
    _
  $region15: #{spatial_attention_forward.8} parent=0 // pred_check_branch
    %19 = sbr.rel (0) target = $region17
  $region16: #{spatial_attention_forward.8} parent=0 // pred_region
    _
  $region17: #{spatial_attention_forward.8} parent=0 // pred_fallthru
    _
  // Predicated region
  $region18: #{spatial_attention_forward.8} parent=0 // pred_check
    _
  $region19: #{spatial_attention_forward.8} parent=0 // pred_check_branch
    %21 = sbr.rel (0) target = $region21
  $region20: #{spatial_attention_forward.8} parent=0 // pred_region
    _
  $region21: #{spatial_attention_forward.8} parent=0 // pred_fallthru
    _
  %v22 = vld [vmem:[%s0] sm:$0xff]
  %v23 = vld [vmem:[%s0 + $0x8] sm:$0xff]
  %vm24 = vcmp.gt.f32.partialorder %v22, -1e+30
  %vm25 = vcmp.gt.f32.partialorder %v23, -1e+30
  %v26 = vsel %vm24, %v22, 0.0
  %v27 = vsel %vm25, %v23, 0.0
  %s28 = scalar_lea.vmem %s0, 16
  %v29 = vld [vmem:[%s28] sm:$0xff]
  %v30 = vld [vmem:[%s28 + $0x8] sm:$0xff]
  %v31 = vmax.f32 %v22, %v29
  %v32 = vmax.f32 %v23, %v30
  %vm33 = vcmp.gt.f32.partialorder %v29, -1e+30
  %vm34 = vcmp.gt.f32.partialorder %v30, -1e+30
  %v35 = vsel %vm33, %v29, 0.0
  %v36 = vsel %vm34, %v30, 0.0
  %v37 = vadd.f32 %v26, %v35
  %v38 = vadd.f32 %v27, %v36
  %s39 = scalar_lea.vmem %s0, 32
  %v40 = vld [vmem:[%s39] sm:$0xff]
  %v41 = vld [vmem:[%s39 + $0x8] sm:$0xff]
  %v42 = vmax.f32 %v31, %v40
  %v43 = vmax.f32 %v32, %v41
  %vm44 = vcmp.gt.f32.partialorder %v40, -1e+30
  %vm45 = vcmp.gt.f32.partialorder %v41, -1e+30
  %v46 = vsel %vm44, %v40, 0.0
  %v47 = vsel %vm45, %v41, 0.0
  %v48 = vadd.f32 %v37, %v46
  %v49 = vadd.f32 %v38, %v47
  %s50 = scalar_lea.vmem %s0, 48
  %v51 = vld [vmem:[%s50] sm:$0xff]
  %v52 = vld [vmem:[%s50 + $0x8] sm:$0xff]
  %v53 = vmax.f32 %v42, %v51
  %v54 = vmax.f32 %v43, %v52
  %vm55 = vcmp.gt.f32.partialorder %v51, -1e+30
  %vm56 = vcmp.gt.f32.partialorder %v52, -1e+30
  %v57 = vsel %vm55, %v51, 0.0
  %v58 = vsel %vm56, %v52, 0.0
  %v59 = vadd.f32 %v48, %v57
  %v60 = vadd.f32 %v49, %v58
  %s61 = scalar_lea.vmem %s0, 64
  %v62 = vld [vmem:[%s61] sm:$0xff]
  %v63 = vld [vmem:[%s61 + $0x8] sm:$0xff]
  %v64 = vmax.f32 %v53, %v62
  %v65 = vmax.f32 %v54, %v63
  %vm66 = vcmp.gt.f32.partialorder %v62, -1e+30
  %vm67 = vcmp.gt.f32.partialorder %v63, -1e+30
  %v68 = vsel %vm66, %v62, 0.0
  %v69 = vsel %vm67, %v63, 0.0
  %v70 = vadd.f32 %v59, %v68
  %v71 = vadd.f32 %v60, %v69
  %s72 = scalar_lea.vmem %s0, 80
  %v73 = vld [vmem:[%s72] sm:$0xff]
  %v74 = vld [vmem:[%s72 + $0x8] sm:$0xff]
  %v75 = vmax.f32 %v64, %v73
  %v76 = vmax.f32 %v65, %v74
  %vm77 = vcmp.gt.f32.partialorder %v73, -1e+30
  %vm78 = vcmp.gt.f32.partialorder %v74, -1e+30
  %v79 = vsel %vm77, %v73, 0.0
  %v80 = vsel %vm78, %v74, 0.0
  %v81 = vadd.f32 %v70, %v79
  %v82 = vadd.f32 %v71, %v80
  %s83 = scalar_lea.vmem %s0, 96
  %v84 = vld [vmem:[%s83] sm:$0xff]
  %v85 = vld [vmem:[%s83 + $0x8] sm:$0xff]
  %v86 = vmax.f32 %v75, %v84
  %v87 = vmax.f32 %v76, %v85
  %vm88 = vcmp.gt.f32.partialorder %v84, -1e+30
  %vm89 = vcmp.gt.f32.partialorder %v85, -1e+30
  %v90 = vsel %vm88, %v84, 0.0
  %v91 = vsel %vm89, %v85, 0.0
  %v92 = vadd.f32 %v81, %v90
  %v93 = vadd.f32 %v82, %v91
  %s94 = scalar_lea.vmem %s0, 112
  %v95 = vld [vmem:[%s94] sm:$0xff]
  %v96 = vld [vmem:[%s94 + $0x8] sm:$0xff]
  %v97 = vmax.f32 %v86, %v95
  %v98 = vmax.f32 %v87, %v96
  %vm99 = vcmp.gt.f32.partialorder %v95, -1e+30
  %vm100 = vcmp.gt.f32.partialorder %v96, -1e+30
  %v101 = vsel %vm99, %v95, 0.0
  %v102 = vsel %vm100, %v96, 0.0
  %v103 = vadd.f32 %v92, %v101
  %v104 = vadd.f32 %v93, %v102
  %s105 = scalar_lea.vmem %s0, 128
  %v106 = vld [vmem:[%s105] sm:$0xff]
  %v107 = vld [vmem:[%s105 + $0x8] sm:$0xff]
  %v108 = vmax.f32 %v97, %v106
  %v109 = vmax.f32 %v98, %v107
  %vm110 = vcmp.gt.f32.partialorder %v106, -1e+30
  %vm111 = vcmp.gt.f32.partialorder %v107, -1e+30
  %v112 = vsel %vm110, %v106, 0.0
  %v113 = vsel %vm111, %v107, 0.0
  %v114 = vadd.f32 %v103, %v112
  %v115 = vadd.f32 %v104, %v113
  %v116 = vmul.f32 %v114, 0.11111111
  %v117 = vmul.f32 %v115, 0.11111111
  %v118 = vld [vmem:[%s1] sm:$0xff]
  %v119 = vld [vmem:[%s1 + $0x8] sm:$0xff]
  %v120 = vld [vmem:[%s2] sm:$0xff]
  %v121 = vld [vmem:[%s2 + $0x8] sm:$0xff]
  %123 = vset.pattern.permute.xlu0 0
  %124 = vperm.xlu0 %123, %v120
  %v125 = vpop.permute.xlu0 %124
  %128 = vset.pattern.permute.xlu0 0
  %129 = vperm.xlu0 %128, %v121
  %v130 = vpop.permute.xlu0 %129
  %vm132 = vcmask 261120
  %v134 = vsel %vm132, %v118, 0
  %v137 = vsel %vm132, %v119, 0
  %139 = vmatpush.msra.mxu0 0.0
  %140 = vmatpush.msra.mxu0 0.0
  %141 = vmatpush.msra.mxu0 0.0
  %142 = vmatpush.msra.mxu0 0.0
  %143 = vmatpush.msra.mxu0 0.0
  %144 = vmatpush.msra.mxu0 0.0
  %145 = vmatpush.msra.mxu0 0.0
  %146 = vmatpush.msra.mxu0 0.0
  %147 = vmatpush.msra.mxu0 0.0
  %148 = vmatpush.msra.mxu0 0.0
  %149 = vmatpush.msra.mxu0 0.0
  %150 = vmatpush.msra.mxu0 0.0
  %151 = vmatpush.msra.mxu0 %v117
  %152 = vmatpush.msra.mxu0 %v116
  %153 = vmatpush.msra.mxu0 %v109
  %154 = vmatpush.msra.mxu0 %v108
  %155 = vmatmul.f32.gmra.mxu0 %v134
  %v156 = vpop.f32.mrf.mxu0
  %v157 = vadd.f32 %v125, %v156
  %158 = vmatmul.f32.gmra.mxu0 %v137
  %v159 = vpop.f32.mrf.mxu0
  %v160 = vadd.f32 %v130, %v159
  %161 = vdwg.mxu0
  %vm162 = vcmp.ge.f32.partialorder %v157, 0.0
  %vm163 = vcmp.ge.f32.partialorder %v160, 0.0
  %v164 = vmul.f32 %v157, 0.1
  %v165 = vmul.f32 %v160, 0.1
  %v166 = vsel %vm162, %v157, %v164
  %v167 = vsel %vm163, %v160, %v165
  %168 = vst [vmem:[%s5] sm:$0xff] %v166
  %169 = vst [vmem:[%s5 + $0x8] sm:$0xff] %v167
  %v170 = vld [vmem:[%s3] sm:$0xff]
  %v171 = vld [vmem:[%s3 + $0x8] sm:$0xff]
  %v172 = vld [vmem:[%s4] sm:$0xff]
  %v173 = vld [vmem:[%s4 + $0x8] sm:$0xff]
  %175 = vset.pattern.permute.xlu0 0
  %176 = vperm.xlu0 %175, %v172
  %v177 = vpop.permute.xlu0 %176
  %180 = vset.pattern.permute.xlu0 0
  %181 = vperm.xlu0 %180, %v173
  %v182 = vpop.permute.xlu0 %181
  %vm184 = vcmask 130048
  %v186 = vsel %vm184, %v170, 0
  %v189 = vsel %vm184, %v171, 0
  %191 = vmatpush.msra.mxu0 0.0
  %192 = vmatpush.msra.mxu0 0.0
  %193 = vmatpush.msra.mxu0 0.0
  %194 = vmatpush.msra.mxu0 0.0
  %195 = vmatpush.msra.mxu0 0.0
  %196 = vmatpush.msra.mxu0 0.0
  %197 = vmatpush.msra.mxu0 0.0
  %198 = vmatpush.msra.mxu0 0.0
  %199 = vmatpush.msra.mxu0 0.0
  %200 = vmatpush.msra.mxu0 0.0
  %201 = vmatpush.msra.mxu0 0.0
  %202 = vmatpush.msra.mxu0 0.0
  %203 = vmatpush.msra.mxu0 0.0
  %204 = vmatpush.msra.mxu0 0.0
  %205 = vmatpush.msra.mxu0 %v167
  %206 = vmatpush.msra.mxu0 %v166
  %207 = vmatmul.f32.gmra.mxu0 %v186
  %v208 = vpop.f32.mrf.mxu0
  %v209 = vadd.f32 %v177, %v208
  %210 = vmatmul.f32.gmra.mxu0 %v189
  %v211 = vpop.f32.mrf.mxu0
  %v212 = vadd.f32 %v182, %v211
  %213 = vdwg.mxu0
  %vm214 = vcmp.ge.f32.partialorder %v209, 0.0
  %vm215 = vcmp.ge.f32.partialorder %v212, 0.0
  %v216 = vmul.f32 %v209, 0.1
  %v217 = vmul.f32 %v212, 0.1
  %v218 = vsel %vm214, %v209, %v216
  %v219 = vsel %vm215, %v212, %v217
  %220 = vst [vmem:[%s6] sm:$0xff] %v218
  %221 = vst [vmem:[%s6 + $0x8] sm:$0xff] %v219
  // Predicated region
  $region22: #{spatial_attention_forward.8} parent=0 // pred_check
    _
  $region23: #{spatial_attention_forward.8} parent=0 // pred_check_branch
    %223 = sbr.rel (0) target = $region25
  $region24: #{spatial_attention_forward.8} parent=0 // pred_region
    _
  $region25: #{spatial_attention_forward.8} parent=0 // pred_fallthru
    _
  // Predicated region
  $region26: #{spatial_attention_forward.8} parent=0 // pred_check
    _
  $region27: #{spatial_attention_forward.8} parent=0 // pred_check_branch
    %225 = sbr.rel (0) target = $region29
  $region28: #{spatial_attention_forward.8} parent=0 // pred_region
    _
  $region29: #{spatial_attention_forward.8} parent=0 // pred_fallthru
    _
  // Predicated region
  $region30: #{spatial_attention_forward.8} parent=0 // pred_check
    _
  $region31: #{spatial_attention_forward.8} parent=0 // pred_check_branch
    %227 = sbr.rel (0) target = $region33
  $region32: #{spatial_attention_forward.8} parent=0 // pred_region
    _
  $region33: #{spatial_attention_forward.8} parent=0 // pred_fallthru
    _
  // Predicated region
  $region34: #{spatial_attention_forward.8} parent=0 // pred_check
    _
  $region35: #{spatial_attention_forward.8} parent=0 // pred_check_branch
    %229 = sbr.rel (0) target = $region37
  $region36: #{spatial_attention_forward.8} parent=0 // pred_region
    _
  $region37: #{spatial_attention_forward.8} parent=0 // pred_fallthru
    _

// kernel: spatial_attention_forward.9
$region0: #{spatial_attention_forward.9}
  #allocation0 [shape = 'u32[]', space=smem, size = 0x4, offset = 0x4, fixed_abs, tag = 'smem constant byte address 0x4 - core index']
  #allocation1 [shape = 'u32[72,128]{1,0:T(1,128)}', space=vmem, size = 0x9000, scoped, tag = 'internal scratch']
  %s0 = inlined_call_operand.vmem [shape: f32[9,16,32], index: 0, kind: input, shape index: {}]
  %s1 = inlined_call_operand.vmem [shape: f32[32,32], index: 1, kind: output, shape index: {}]
  %s2 = sld [smem:[#allocation0]]
  $region14: #{spatial_attention_forward.9} parent=0
    _
  %s4 = ssub.s32 1, %s2
  %s5 = scalar_select 0, %s4, %s2
  // Predicated region
  $region2: #{spatial_attention_forward.9} parent=0 // pred_check
    _
  $region3: #{spatial_attention_forward.9} parent=0 // pred_check_branch
    %7 = sbr.rel (0) target = $region5
  $region4: #{spatial_attention_forward.9} parent=0 // pred_region
    _
  $region5: #{spatial_attention_forward.9} parent=0 // pred_fallthru
    _
  %v8 = vld [vmem:[%s0] sm:$0xff]
  %v9 = vld [vmem:[%s0 + $0x8] sm:$0xff]
  %vm10 = vcmp.gt.f32.partialorder %v8, -1e+30
  %vm11 = vcmp.gt.f32.partialorder %v9, -1e+30
  %v12 = vsel %vm10, %v8, 0.0
  %v13 = vsel %vm11, %v9, 0.0
  %s14 = scalar_lea.vmem %s0, 16
  %v15 = vld [vmem:[%s14] sm:$0xff]
  %v16 = vld [vmem:[%s14 + $0x8] sm:$0xff]
  %v17 = vmax.f32 %v8, %v15
  %v18 = vmax.f32 %v9, %v16
  %vm19 = vcmp.gt.f32.partialorder %v15, -1e+30
  %vm20 = vcmp.gt.f32.partialorder %v16, -1e+30
  %v21 = vsel %vm19, %v15, 0.0
  %v22 = vsel %vm20, %v16, 0.0
  %v23 = vadd.f32 %v12, %v21
  %v24 = vadd.f32 %v13, %v22
  %s25 = scalar_lea.vmem %s0, 32
  %v26 = vld [vmem:[%s25] sm:$0xff]
  %v27 = vld [vmem:[%s25 + $0x8] sm:$0xff]
  %v28 = vmax.f32 %v17, %v26
  %v29 = vmax.f32 %v18, %v27
  %vm30 = vcmp.gt.f32.partialorder %v26, -1e+30
  %vm31 = vcmp.gt.f32.partialorder %v27, -1e+30
  %v32 = vsel %vm30, %v26, 0.0
  %v33 = vsel %vm31, %v27, 0.0
  %v34 = vadd.f32 %v23, %v32
  %v35 = vadd.f32 %v24, %v33
  %s36 = scalar_lea.vmem %s0, 48
  %v37 = vld [vmem:[%s36] sm:$0xff]
  %v38 = vld [vmem:[%s36 + $0x8] sm:$0xff]
  %v39 = vmax.f32 %v28, %v37
  %v40 = vmax.f32 %v29, %v38
  %vm41 = vcmp.gt.f32.partialorder %v37, -1e+30
  %vm42 = vcmp.gt.f32.partialorder %v38, -1e+30
  %v43 = vsel %vm41, %v37, 0.0
  %v44 = vsel %vm42, %v38, 0.0
  %v45 = vadd.f32 %v34, %v43
  %v46 = vadd.f32 %v35, %v44
  %s47 = scalar_lea.vmem %s0, 64
  %v48 = vld [vmem:[%s47] sm:$0xff]
  %v49 = vld [vmem:[%s47 + $0x8] sm:$0xff]
  %v50 = vmax.f32 %v39, %v48
  %v51 = vmax.f32 %v40, %v49
  %vm52 = vcmp.gt.f32.partialorder %v48, -1e+30
  %vm53 = vcmp.gt.f32.partialorder %v49, -1e+30
  %v54 = vsel %vm52, %v48, 0.0
  %v55 = vsel %vm53, %v49, 0.0
  %v56 = vadd.f32 %v45, %v54
  %v57 = vadd.f32 %v46, %v55
  %s58 = scalar_lea.vmem %s0, 80
  %v59 = vld [vmem:[%s58] sm:$0xff]
  %v60 = vld [vmem:[%s58 + $0x8] sm:$0xff]
  %v61 = vmax.f32 %v50, %v59
  %v62 = vmax.f32 %v51, %v60
  %vm63 = vcmp.gt.f32.partialorder %v59, -1e+30
  %vm64 = vcmp.gt.f32.partialorder %v60, -1e+30
  %v65 = vsel %vm63, %v59, 0.0
  %v66 = vsel %vm64, %v60, 0.0
  %v67 = vadd.f32 %v56, %v65
  %v68 = vadd.f32 %v57, %v66
  %s69 = scalar_lea.vmem %s0, 96
  %v70 = vld [vmem:[%s69] sm:$0xff]
  %v71 = vld [vmem:[%s69 + $0x8] sm:$0xff]
  %v72 = vmax.f32 %v61, %v70
  %v73 = vmax.f32 %v62, %v71
  %vm74 = vcmp.gt.f32.partialorder %v70, -1e+30
  %vm75 = vcmp.gt.f32.partialorder %v71, -1e+30
  %v76 = vsel %vm74, %v70, 0.0
  %v77 = vsel %vm75, %v71, 0.0
  %v78 = vadd.f32 %v67, %v76
  %v79 = vadd.f32 %v68, %v77
  %s80 = scalar_lea.vmem %s0, 112
  %v81 = vld [vmem:[%s80] sm:$0xff]
  %v82 = vld [vmem:[%s80 + $0x8] sm:$0xff]
  %v83 = vmax.f32 %v72, %v81
  %v84 = vmax.f32 %v73, %v82
  %vm85 = vcmp.gt.f32.partialorder %v81, -1e+30
  %vm86 = vcmp.gt.f32.partialorder %v82, -1e+30
  %v87 = vsel %vm85, %v81, 0.0
  %v88 = vsel %vm86, %v82, 0.0
  %v89 = vadd.f32 %v78, %v87
  %v90 = vadd.f32 %v79, %v88
  %s91 = scalar_lea.vmem %s0, 128
  %v92 = vld [vmem:[%s91] sm:$0xff]
  %v93 = vld [vmem:[%s91 + $0x8] sm:$0xff]
  %v94 = vmax.f32 %v83, %v92
  %v95 = vmax.f32 %v84, %v93
  %vm96 = vcmp.gt.f32.partialorder %v92, -1e+30
  %vm97 = vcmp.gt.f32.partialorder %v93, -1e+30
  %v98 = vsel %vm96, %v92, 0.0
  %v99 = vsel %vm97, %v93, 0.0
  %v100 = vadd.f32 %v89, %v98
  %v101 = vadd.f32 %v90, %v99
  %v102 = vmul.f32 %v100, 0.11111111
  %v103 = vmul.f32 %v101, 0.11111111
  %vm104 = vcmask 261120
  %105 = vst.msk [vmem:[%s1] sm:$0xff] %vm104, %v94
  %106 = vst.msk [vmem:[%s1 + $0x8] sm:$0xff] %vm104, %v95
  %107 = vst.msk [vmem:[%s1 + $0x10] sm:$0xff] %vm104, %v102
  %108 = vst.msk [vmem:[%s1 + $0x18] sm:$0xff] %vm104, %v103
  // Predicated region
  $region6: #{spatial_attention_forward.9} parent=0 // pred_check
    _
  $region7: #{spatial_attention_forward.9} parent=0 // pred_check_branch
    %110 = sbr.rel (0) target = $region9
  $region8: #{spatial_attention_forward.9} parent=0 // pred_region
    _
  $region9: #{spatial_attention_forward.9} parent=0 // pred_fallthru
    _
  // Predicated region
  $region10: #{spatial_attention_forward.9} parent=0 // pred_check
    _
  $region11: #{spatial_attention_forward.9} parent=0 // pred_check_branch
    %112 = sbr.rel (0) target = $region13
  $region12: #{spatial_attention_forward.9} parent=0 // pred_region
    _
  $region13: #{spatial_attention_forward.9} parent=0 // pred_fallthru
    _

// kernel: spatial_attention_forward.10
$region0: #{spatial_attention_forward.10}
  #allocation0 [shape = 'u32[]', space=smem, size = 0x4, offset = 0x4, fixed_abs, tag = 'smem constant byte address 0x4 - core index']
  #allocation1 [shape = 'u32[72,128]{1,0:T(1,128)}', space=vmem, size = 0x9000, scoped, tag = 'internal scratch']
  %s0 = inlined_call_operand.vmem [shape: f32[288,32], index: 0, kind: input, shape index: {}]
  %s1 = inlined_call_operand.vmem [shape: f32[16,288], index: 1, kind: input, shape index: {}]
  %s2 = inlined_call_operand.vmem [shape: f32[16,1], index: 2, kind: input, shape index: {}]
  %s3 = inlined_call_operand.vmem [shape: f32[16,32], index: 3, kind: output, shape index: {}]
  %s4 = sld [smem:[#allocation0]]
  $region22: #{spatial_attention_forward.10} parent=0
    _
  %s6 = ssub.s32 1, %s4
  %s7 = scalar_select 0, %s6, %s4
  // Predicated region
  $region2: #{spatial_attention_forward.10} parent=0 // pred_check
    _
  $region3: #{spatial_attention_forward.10} parent=0 // pred_check_branch
    %9 = sbr.rel (0) target = $region5
  $region4: #{spatial_attention_forward.10} parent=0 // pred_region
    _
  $region5: #{spatial_attention_forward.10} parent=0 // pred_fallthru
    _
  // Predicated region
  $region6: #{spatial_attention_forward.10} parent=0 // pred_check
    _
  $region7: #{spatial_attention_forward.10} parent=0 // pred_check_branch
    %11 = sbr.rel (0) target = $region9
  $region8: #{spatial_attention_forward.10} parent=0 // pred_region
    _
  $region9: #{spatial_attention_forward.10} parent=0 // pred_fallthru
    _
  // Predicated region
  $region10: #{spatial_attention_forward.10} parent=0 // pred_check
    _
  $region11: #{spatial_attention_forward.10} parent=0 // pred_check_branch
    %13 = sbr.rel (0) target = $region13
  $region12: #{spatial_attention_forward.10} parent=0 // pred_region
    _
  $region13: #{spatial_attention_forward.10} parent=0 // pred_fallthru
    _
  %v14 = vld [vmem:[%s1] sm:$0xff]
  %v15 = vld [vmem:[%s1 + $0x8] sm:$0xff]
  %v16 = vld [vmem:[%s1 + $0x10] sm:$0xff]
  %v17 = vld [vmem:[%s1 + $0x18] sm:$0xff]
  %v18 = vld [vmem:[%s1 + $0x20] sm:$0xff]
  %v19 = vld [vmem:[%s1 + $0x28] sm:$0xff]
  %v20 = vld [vmem:[%s0] sm:$0xff]
  %v21 = vld [vmem:[%s0 + $0x8] sm:$0xff]
  %v22 = vld [vmem:[%s0 + $0x10] sm:$0xff]
  %v23 = vld [vmem:[%s0 + $0x18] sm:$0xff]
  %v24 = vld [vmem:[%s0 + $0x20] sm:$0xff]
  %v25 = vld [vmem:[%s0 + $0x28] sm:$0xff]
  %v26 = vld [vmem:[%s0 + $0x30] sm:$0xff]
  %v27 = vld [vmem:[%s0 + $0x38] sm:$0xff]
  %v28 = vld [vmem:[%s0 + $0x40] sm:$0xff]
  %v29 = vld [vmem:[%s0 + $0x48] sm:$0xff]
  %v30 = vld [vmem:[%s0 + $0x50] sm:$0xff]
  %v31 = vld [vmem:[%s0 + $0x58] sm:$0xff]
  %v32 = vld [vmem:[%s0 + $0x60] sm:$0xff]
  %v33 = vld [vmem:[%s0 + $0x68] sm:$0xff]
  %v34 = vld [vmem:[%s0 + $0x70] sm:$0xff]
  %v35 = vld [vmem:[%s0 + $0x78] sm:$0xff]
  %v36 = vld [vmem:[%s0 + $0x80] sm:$0xff]
  %v37 = vld [vmem:[%s0 + $0x88] sm:$0xff]
  %v38 = vld [vmem:[%s0 + $0x90] sm:$0xff]
  %v39 = vld [vmem:[%s0 + $0x98] sm:$0xff]
  %v40 = vld [vmem:[%s0 + $0xa0] sm:$0xff]
  %v41 = vld [vmem:[%s0 + $0xa8] sm:$0xff]
  %v42 = vld [vmem:[%s0 + $0xb0] sm:$0xff]
  %v43 = vld [vmem:[%s0 + $0xb8] sm:$0xff]
  %v44 = vld [vmem:[%s0 + $0xc0] sm:$0xff]
  %v45 = vld [vmem:[%s0 + $0xc8] sm:$0xff]
  %v46 = vld [vmem:[%s0 + $0xd0] sm:$0xff]
  %v47 = vld [vmem:[%s0 + $0xd8] sm:$0xff]
  %v48 = vld [vmem:[%s0 + $0xe0] sm:$0xff]
  %v49 = vld [vmem:[%s0 + $0xe8] sm:$0xff]
  %v50 = vld [vmem:[%s0 + $0xf0] sm:$0xff]
  %v51 = vld [vmem:[%s0 + $0xf8] sm:$0xff]
  %v52 = vld [vmem:[%s0 + $0x100] sm:$0xff]
  %v53 = vld [vmem:[%s0 + $0x108] sm:$0xff]
  %v54 = vld [vmem:[%s0 + $0x110] sm:$0xff]
  %v55 = vld [vmem:[%s0 + $0x118] sm:$0xff]
  %v56 = vld [vmem:[%s2] sm:$0xff]
  %v57 = vld [vmem:[%s2 + $0x8] sm:$0xff]
  %59 = vset.pattern.permute.xlu0 0
  %60 = vperm.xlu0 %59, %v56
  %v61 = vpop.permute.xlu0 %60
  %64 = vset.pattern.permute.xlu0 0
  %65 = vperm.xlu0 %64, %v57
  %v66 = vpop.permute.xlu0 %65
  %vm68 = vcmask 261120
  %v70 = vsel %vm68, %v16, 0
  %v73 = vsel %vm68, %v19, 0
  %75 = vmatpush.msra.mxu0 %v35
  %76 = vmatpush.msra.mxu0 %v34
  %77 = vmatpush.msra.mxu0 %v33
  %78 = vmatpush.msra.mxu0 %v32
  %79 = vmatpush.msra.mxu0 %v31
  %80 = vmatpush.msra.mxu0 %v30
  %81 = vmatpush.msra.mxu0 %v29
  %82 = vmatpush.msra.mxu0 %v28
  %83 = vmatpush.msra.mxu0 %v27
  %84 = vmatpush.msra.mxu0 %v26
  %85 = vmatpush.msra.mxu0 %v25
  %86 = vmatpush.msra.mxu0 %v24
  %87 = vmatpush.msra.mxu0 %v23
  %88 = vmatpush.msra.mxu0 %v22
  %89 = vmatpush.msra.mxu0 %v21
  %90 = vmatpush.msra.mxu0 %v20
  %91 = vmatmul.f32.gmra.mxu0 %v14
  %v92 = vpop.f32.mrf.mxu0
  %v93 = vadd.f32 %v61, %v92
  %94 = vmatmul.f32.gmra.mxu0 %v17
  %v95 = vpop.f32.mrf.mxu0
  %v96 = vadd.f32 %v66, %v95
  %97 = vdwg.mxu0
  %98 = vmatpush.msra.mxu0 %v51
  %99 = vmatpush.msra.mxu0 %v50
  %100 = vmatpush.msra.mxu0 %v49
  %101 = vmatpush.msra.mxu0 %v48
  %102 = vmatpush.msra.mxu0 %v47
  %103 = vmatpush.msra.mxu0 %v46
  %104 = vmatpush.msra.mxu0 %v45
  %105 = vmatpush.msra.mxu0 %v44
  %106 = vmatpush.msra.mxu0 %v43
  %107 = vmatpush.msra.mxu0 %v42
  %108 = vmatpush.msra.mxu0 %v41
  %109 = vmatpush.msra.mxu0 %v40
  %110 = vmatpush.msra.mxu0 %v39
  %111 = vmatpush.msra.mxu0 %v38
  %112 = vmatpush.msra.mxu0 %v37
  %113 = vmatpush.msra.mxu0 %v36
  %114 = vmatmul.f32.gmra.mxu0 %v15
  %v115 = vpop.f32.mrf.mxu0
  %v116 = vadd.f32 %v93, %v115
  %117 = vmatmul.f32.gmra.mxu0 %v18
  %v118 = vpop.f32.mrf.mxu0
  %v119 = vadd.f32 %v96, %v118
  %120 = vdwg.mxu0
  %121 = vmatpush.msra.mxu0 0.0
  %122 = vmatpush.msra.mxu0 0.0
  %123 = vmatpush.msra.mxu0 0.0
  %124 = vmatpush.msra.mxu0 0.0
  %125 = vmatpush.msra.mxu0 0.0
  %126 = vmatpush.msra.mxu0 0.0
  %127 = vmatpush.msra.mxu0 0.0
  %128 = vmatpush.msra.mxu0 0.0
  %129 = vmatpush.msra.mxu0 0.0
  %130 = vmatpush.msra.mxu0 0.0
  %131 = vmatpush.msra.mxu0 0.0
  %132 = vmatpush.msra.mxu0 0.0
  %133 = vmatpush.msra.mxu0 %v55
  %134 = vmatpush.msra.mxu0 %v54
  %135 = vmatpush.msra.mxu0 %v53
  %136 = vmatpush.msra.mxu0 %v52
  %137 = vmatmul.f32.gmra.mxu0 %v70
  %v138 = vpop.f32.mrf.mxu0
  %v139 = vadd.f32 %v116, %v138
  %140 = vmatmul.f32.gmra.mxu0 %v73
  %v141 = vpop.f32.mrf.mxu0
  %v142 = vadd.f32 %v119, %v141
  %143 = vdwg.mxu0
  %vm144 = vcmp.ge.f32.partialorder %v139, 0.0
  %vm145 = vcmp.ge.f32.partialorder %v142, 0.0
  %v146 = vmul.f32 %v139, 0.1
  %v147 = vmul.f32 %v142, 0.1
  %v148 = vsel %vm144, %v139, %v146
  %v149 = vsel %vm145, %v142, %v147
  %150 = vst.msk [vmem:[%s3] sm:$0xff] %vm68, %v148
  %151 = vst.msk [vmem:[%s3 + $0x8] sm:$0xff] %vm68, %v149
  // Predicated region
  $region14: #{spatial_attention_forward.10} parent=0 // pred_check
    _
  $region15: #{spatial_attention_forward.10} parent=0 // pred_check_branch
    %153 = sbr.rel (0) target = $region17
  $region16: #{spatial_attention_forward.10} parent=0 // pred_region
    _
  $region17: #{spatial_attention_forward.10} parent=0 // pred_fallthru
    _
  // Predicated region
  $region18: #{spatial_attention_forward.10} parent=0 // pred_check
    _
  $region19: #{spatial_attention_forward.10} parent=0 // pred_check_branch
    %155 = sbr.rel (0) target = $region21
  $region20: #{spatial_attention_forward.10} parent=0 // pred_region
    _
  $region21: #{spatial_attention_forward.10} parent=0 // pred_fallthru
    _

// kernel: spatial_attention_forward.11
$region0: #{spatial_attention_forward.11}
  #allocation0 [shape = 'u32[]', space=smem, size = 0x4, offset = 0x4, fixed_abs, tag = 'smem constant byte address 0x4 - core index']
  #allocation1 [shape = 'u32[72,128]{1,0:T(1,128)}', space=vmem, size = 0x9000, scoped, tag = 'internal scratch']
  %s0 = inlined_call_operand.vmem [shape: f32[144,32], index: 0, kind: input, shape index: {}]
  %s1 = inlined_call_operand.vmem [shape: f32[16,144], index: 1, kind: input, shape index: {}]
  %s2 = inlined_call_operand.vmem [shape: f32[16,1], index: 2, kind: input, shape index: {}]
  %s3 = inlined_call_operand.vmem [shape: f32[16,32], index: 3, kind: output, shape index: {}]
  %s4 = sld [smem:[#allocation0]]
  $region22: #{spatial_attention_forward.11} parent=0
    _
  %s6 = ssub.s32 1, %s4
  %s7 = scalar_select 0, %s6, %s4
  // Predicated region
  $region2: #{spatial_attention_forward.11} parent=0 // pred_check
    _
  $region3: #{spatial_attention_forward.11} parent=0 // pred_check_branch
    %9 = sbr.rel (0) target = $region5
  $region4: #{spatial_attention_forward.11} parent=0 // pred_region
    _
  $region5: #{spatial_attention_forward.11} parent=0 // pred_fallthru
    _
  // Predicated region
  $region6: #{spatial_attention_forward.11} parent=0 // pred_check
    _
  $region7: #{spatial_attention_forward.11} parent=0 // pred_check_branch
    %11 = sbr.rel (0) target = $region9
  $region8: #{spatial_attention_forward.11} parent=0 // pred_region
    _
  $region9: #{spatial_attention_forward.11} parent=0 // pred_fallthru
    _
  // Predicated region
  $region10: #{spatial_attention_forward.11} parent=0 // pred_check
    _
  $region11: #{spatial_attention_forward.11} parent=0 // pred_check_branch
    %13 = sbr.rel (0) target = $region13
  $region12: #{spatial_attention_forward.11} parent=0 // pred_region
    _
  $region13: #{spatial_attention_forward.11} parent=0 // pred_fallthru
    _
  %v14 = vld [vmem:[%s1] sm:$0xff]
  %v15 = vld [vmem:[%s1 + $0x8] sm:$0xff]
  %v16 = vld [vmem:[%s1 + $0x10] sm:$0xff]
  %v17 = vld [vmem:[%s1 + $0x18] sm:$0xff]
  %v18 = vld [vmem:[%s0] sm:$0xff]
  %v19 = vld [vmem:[%s0 + $0x8] sm:$0xff]
  %v20 = vld [vmem:[%s0 + $0x10] sm:$0xff]
  %v21 = vld [vmem:[%s0 + $0x18] sm:$0xff]
  %v22 = vld [vmem:[%s0 + $0x20] sm:$0xff]
  %v23 = vld [vmem:[%s0 + $0x28] sm:$0xff]
  %v24 = vld [vmem:[%s0 + $0x30] sm:$0xff]
  %v25 = vld [vmem:[%s0 + $0x38] sm:$0xff]
  %v26 = vld [vmem:[%s0 + $0x40] sm:$0xff]
  %v27 = vld [vmem:[%s0 + $0x48] sm:$0xff]
  %v28 = vld [vmem:[%s0 + $0x50] sm:$0xff]
  %v29 = vld [vmem:[%s0 + $0x58] sm:$0xff]
  %v30 = vld [vmem:[%s0 + $0x60] sm:$0xff]
  %v31 = vld [vmem:[%s0 + $0x68] sm:$0xff]
  %v32 = vld [vmem:[%s0 + $0x70] sm:$0xff]
  %v33 = vld [vmem:[%s0 + $0x78] sm:$0xff]
  %v34 = vld [vmem:[%s0 + $0x80] sm:$0xff]
  %v35 = vld [vmem:[%s0 + $0x88] sm:$0xff]
  %v36 = vld [vmem:[%s2] sm:$0xff]
  %v37 = vld [vmem:[%s2 + $0x8] sm:$0xff]
  %39 = vset.pattern.permute.xlu0 0
  %40 = vperm.xlu0 %39, %v36
  %v41 = vpop.permute.xlu0 %40
  %44 = vset.pattern.permute.xlu0 0
  %45 = vperm.xlu0 %44, %v37
  %v46 = vpop.permute.xlu0 %45
  %vm48 = vcmask 130048
  %v50 = vsel %vm48, %v15, 0
  %v53 = vsel %vm48, %v17, 0
  %55 = vmatpush.msra.mxu0 %v33
  %56 = vmatpush.msra.mxu0 %v32
  %57 = vmatpush.msra.mxu0 %v31
  %58 = vmatpush.msra.mxu0 %v30
  %59 = vmatpush.msra.mxu0 %v29
  %60 = vmatpush.msra.mxu0 %v28
  %61 = vmatpush.msra.mxu0 %v27
  %62 = vmatpush.msra.mxu0 %v26
  %63 = vmatpush.msra.mxu0 %v25
  %64 = vmatpush.msra.mxu0 %v24
  %65 = vmatpush.msra.mxu0 %v23
  %66 = vmatpush.msra.mxu0 %v22
  %67 = vmatpush.msra.mxu0 %v21
  %68 = vmatpush.msra.mxu0 %v20
  %69 = vmatpush.msra.mxu0 %v19
  %70 = vmatpush.msra.mxu0 %v18
  %71 = vmatmul.f32.gmra.mxu0 %v14
  %v72 = vpop.f32.mrf.mxu0
  %v73 = vadd.f32 %v41, %v72
  %74 = vmatmul.f32.gmra.mxu0 %v16
  %v75 = vpop.f32.mrf.mxu0
  %v76 = vadd.f32 %v46, %v75
  %77 = vdwg.mxu0
  %78 = vmatpush.msra.mxu0 0.0
  %79 = vmatpush.msra.mxu0 0.0
  %80 = vmatpush.msra.mxu0 0.0
  %81 = vmatpush.msra.mxu0 0.0
  %82 = vmatpush.msra.mxu0 0.0
  %83 = vmatpush.msra.mxu0 0.0
  %84 = vmatpush.msra.mxu0 0.0
  %85 = vmatpush.msra.mxu0 0.0
  %86 = vmatpush.msra.mxu0 0.0
  %87 = vmatpush.msra.mxu0 0.0
  %88 = vmatpush.msra.mxu0 0.0
  %89 = vmatpush.msra.mxu0 0.0
  %90 = vmatpush.msra.mxu0 0.0
  %91 = vmatpush.msra.mxu0 0.0
  %92 = vmatpush.msra.mxu0 %v35
  %93 = vmatpush.msra.mxu0 %v34
  %94 = vmatmul.f32.gmra.mxu0 %v50
  %v95 = vpop.f32.mrf.mxu0
  %v96 = vadd.f32 %v73, %v95
  %97 = vmatmul.f32.gmra.mxu0 %v53
  %v98 = vpop.f32.mrf.mxu0
  %v99 = vadd.f32 %v76, %v98
  %100 = vdwg.mxu0
  %vm101 = vcmp.ge.f32.partialorder %v96, 0.0
  %vm102 = vcmp.ge.f32.partialorder %v99, 0.0
  %v103 = vmul.f32 %v96, 0.1
  %v104 = vmul.f32 %v99, 0.1
  %v105 = vsel %vm101, %v96, %v103
  %v106 = vsel %vm102, %v99, %v104
  %vm107 = vcmask 261120
  %108 = vst.msk [vmem:[%s3] sm:$0xff] %vm107, %v105
  %109 = vst.msk [vmem:[%s3 + $0x8] sm:$0xff] %vm107, %v106
  // Predicated region
  $region14: #{spatial_attention_forward.11} parent=0 // pred_check
    _
  $region15: #{spatial_attention_forward.11} parent=0 // pred_check_branch
    %111 = sbr.rel (0) target = $region17
  $region16: #{spatial_attention_forward.11} parent=0 // pred_region
    _
  $region17: #{spatial_attention_forward.11} parent=0 // pred_fallthru
    _
  // Predicated region
  $region18: #{spatial_attention_forward.11} parent=0 // pred_check
    _
  $region19: #{spatial_attention_forward.11} parent=0 // pred_check_branch
    %113 = sbr.rel (0) target = $region21
  $region20: #{spatial_attention_forward.11} parent=0 // pred_region
    _
  $region21: #{spatial_attention_forward.11} parent=0 // pred_fallthru
    _

// kernel: spatial_attention_forward.12
$region0: #{spatial_attention_forward.12}
  #allocation0 [shape = 'u32[]', space=smem, size = 0x4, offset = 0x4, fixed_abs, tag = 'smem constant byte address 0x4 - core index']
  #allocation1 [shape = 'u32[72,128]{1,0:T(1,128)}', space=vmem, size = 0x9000, scoped, tag = 'internal scratch']
  %s0 = inlined_call_operand.vmem [shape: f32[144,128], index: 0, kind: input, shape index: {}]
  %s1 = inlined_call_operand.vmem [shape: f32[16,128], index: 1, kind: input, shape index: {}]
  %s2 = inlined_call_operand.vmem [shape: f32[16,144], index: 2, kind: input, shape index: {}]
  %s3 = inlined_call_operand.vmem [shape: f32[16,1], index: 3, kind: input, shape index: {}]
  %s4 = inlined_call_operand.vmem [shape: f32[16,16], index: 4, kind: input, shape index: {}]
  %s5 = inlined_call_operand.vmem [shape: f32[16,1], index: 5, kind: input, shape index: {}]
  %s6 = inlined_call_operand.vmem [shape: f32[16,128], index: 6, kind: output, shape index: {}]
  %s7 = sld [smem:[#allocation0]]
  $region34: #{spatial_attention_forward.12} parent=0
    _
  %s9 = ssub.s32 1, %s7
  %s10 = scalar_select 0, %s9, %s7
  // Predicated region
  $region2: #{spatial_attention_forward.12} parent=0 // pred_check
    _
  $region3: #{spatial_attention_forward.12} parent=0 // pred_check_branch
    %12 = sbr.rel (0) target = $region5
  $region4: #{spatial_attention_forward.12} parent=0 // pred_region
    _
  $region5: #{spatial_attention_forward.12} parent=0 // pred_fallthru
    _
  // Predicated region
  $region6: #{spatial_attention_forward.12} parent=0 // pred_check
    _
  $region7: #{spatial_attention_forward.12} parent=0 // pred_check_branch
    %14 = sbr.rel (0) target = $region9
  $region8: #{spatial_attention_forward.12} parent=0 // pred_region
    _
  $region9: #{spatial_attention_forward.12} parent=0 // pred_fallthru
    _
  // Predicated region
  $region10: #{spatial_attention_forward.12} parent=0 // pred_check
    _
  $region11: #{spatial_attention_forward.12} parent=0 // pred_check_branch
    %16 = sbr.rel (0) target = $region13
  $region12: #{spatial_attention_forward.12} parent=0 // pred_region
    _
  $region13: #{spatial_attention_forward.12} parent=0 // pred_fallthru
    _
  // Predicated region
  $region14: #{spatial_attention_forward.12} parent=0 // pred_check
    _
  $region15: #{spatial_attention_forward.12} parent=0 // pred_check_branch
    %18 = sbr.rel (0) target = $region17
  $region16: #{spatial_attention_forward.12} parent=0 // pred_region
    _
  $region17: #{spatial_attention_forward.12} parent=0 // pred_fallthru
    _
  // Predicated region
  $region18: #{spatial_attention_forward.12} parent=0 // pred_check
    _
  $region19: #{spatial_attention_forward.12} parent=0 // pred_check_branch
    %20 = sbr.rel (0) target = $region21
  $region20: #{spatial_attention_forward.12} parent=0 // pred_region
    _
  $region21: #{spatial_attention_forward.12} parent=0 // pred_fallthru
    _
  // Predicated region
  $region22: #{spatial_attention_forward.12} parent=0 // pred_check
    _
  $region23: #{spatial_attention_forward.12} parent=0 // pred_check_branch
    %22 = sbr.rel (0) target = $region25
  $region24: #{spatial_attention_forward.12} parent=0 // pred_region
    _
  $region25: #{spatial_attention_forward.12} parent=0 // pred_fallthru
    _
  %v23 = vld [vmem:[%s2] sm:$0xff]
  %v24 = vld [vmem:[%s2 + $0x8] sm:$0xff]
  %v25 = vld [vmem:[%s2 + $0x10] sm:$0xff]
  %v26 = vld [vmem:[%s2 + $0x18] sm:$0xff]
  %v27 = vld [vmem:[%s0] sm:$0xff]
  %v28 = vld [vmem:[%s0 + $0x8] sm:$0xff]
  %v29 = vld [vmem:[%s0 + $0x10] sm:$0xff]
  %v30 = vld [vmem:[%s0 + $0x18] sm:$0xff]
  %v31 = vld [vmem:[%s0 + $0x20] sm:$0xff]
  %v32 = vld [vmem:[%s0 + $0x28] sm:$0xff]
  %v33 = vld [vmem:[%s0 + $0x30] sm:$0xff]
  %v34 = vld [vmem:[%s0 + $0x38] sm:$0xff]
  %v35 = vld [vmem:[%s0 + $0x40] sm:$0xff]
  %v36 = vld [vmem:[%s0 + $0x48] sm:$0xff]
  %v37 = vld [vmem:[%s0 + $0x50] sm:$0xff]
  %v38 = vld [vmem:[%s0 + $0x58] sm:$0xff]
  %v39 = vld [vmem:[%s0 + $0x60] sm:$0xff]
  %v40 = vld [vmem:[%s0 + $0x68] sm:$0xff]
  %v41 = vld [vmem:[%s0 + $0x70] sm:$0xff]
  %v42 = vld [vmem:[%s0 + $0x78] sm:$0xff]
  %v43 = vld [vmem:[%s0 + $0x80] sm:$0xff]
  %v44 = vld [vmem:[%s0 + $0x88] sm:$0xff]
  %v45 = vld [vmem:[%s3] sm:$0xff]
  %v46 = vld [vmem:[%s3 + $0x8] sm:$0xff]
  %48 = vset.pattern.permute.xlu0 0
  %49 = vperm.xlu0 %48, %v45
  %v50 = vpop.permute.xlu0 %49
  %53 = vset.pattern.permute.xlu0 0
  %54 = vperm.xlu0 %53, %v46
  %v55 = vpop.permute.xlu0 %54
  %vm57 = vcmask 130048
  %v59 = vsel %vm57, %v24, 0
  %v62 = vsel %vm57, %v26, 0
  %64 = vmatpush.msra.mxu0 %v42
  %65 = vmatpush.msra.mxu0 %v41
  %66 = vmatpush.msra.mxu0 %v40
  %67 = vmatpush.msra.mxu0 %v39
  %68 = vmatpush.msra.mxu0 %v38
  %69 = vmatpush.msra.mxu0 %v37
  %70 = vmatpush.msra.mxu0 %v36
  %71 = vmatpush.msra.mxu0 %v35
  %72 = vmatpush.msra.mxu0 %v34
  %73 = vmatpush.msra.mxu0 %v33
  %74 = vmatpush.msra.mxu0 %v32
  %75 = vmatpush.msra.mxu0 %v31
  %76 = vmatpush.msra.mxu0 %v30
  %77 = vmatpush.msra.mxu0 %v29
  %78 = vmatpush.msra.mxu0 %v28
  %79 = vmatpush.msra.mxu0 %v27
  %80 = vmatmul.f32.gmra.mxu0 %v23
  %v81 = vpop.f32.mrf.mxu0
  %v82 = vadd.f32 %v50, %v81
  %83 = vmatmul.f32.gmra.mxu0 %v25
  %v84 = vpop.f32.mrf.mxu0
  %v85 = vadd.f32 %v55, %v84
  %86 = vdwg.mxu0
  %87 = vmatpush.msra.mxu0 0.0
  %88 = vmatpush.msra.mxu0 0.0
  %89 = vmatpush.msra.mxu0 0.0
  %90 = vmatpush.msra.mxu0 0.0
  %91 = vmatpush.msra.mxu0 0.0
  %92 = vmatpush.msra.mxu0 0.0
  %93 = vmatpush.msra.mxu0 0.0
  %94 = vmatpush.msra.mxu0 0.0
  %95 = vmatpush.msra.mxu0 0.0
  %96 = vmatpush.msra.mxu0 0.0
  %97 = vmatpush.msra.mxu0 0.0
  %98 = vmatpush.msra.mxu0 0.0
  %99 = vmatpush.msra.mxu0 0.0
  %100 = vmatpush.msra.mxu0 0.0
  %101 = vmatpush.msra.mxu0 %v44
  %102 = vmatpush.msra.mxu0 %v43
  %103 = vmatmul.f32.gmra.mxu0 %v59
  %v104 = vpop.f32.mrf.mxu0
  %v105 = vadd.f32 %v82, %v104
  %106 = vmatmul.f32.gmra.mxu0 %v62
  %v107 = vpop.f32.mrf.mxu0
  %v108 = vadd.f32 %v85, %v107
  %109 = vdwg.mxu0
  %vm110 = vcmp.ge.f32.partialorder %v105, 0.0
  %vm111 = vcmp.ge.f32.partialorder %v108, 0.0
  %v112 = vmul.f32 %v105, 0.1
  %v113 = vmul.f32 %v108, 0.1
  %v114 = vsel %vm110, %v105, %v112
  %v115 = vsel %vm111, %v108, %v113
  %v116 = vld [vmem:[%s1] sm:$0xff]
  %v117 = vld [vmem:[%s1 + $0x8] sm:$0xff]
  %v118 = vadd.f32 %v114, %v116
  %v119 = vadd.f32 %v115, %v117
  %v120 = vld [vmem:[%s4] sm:$0xff]
  %v121 = vld [vmem:[%s4 + $0x8] sm:$0xff]
  %v122 = vld [vmem:[%s5] sm:$0xff]
  %v123 = vld [vmem:[%s5 + $0x8] sm:$0xff]
  %125 = vset.pattern.permute.xlu0 0
  %126 = vperm.xlu0 %125, %v122
  %v127 = vpop.permute.xlu0 %126
  %130 = vset.pattern.permute.xlu0 0
  %131 = vperm.xlu0 %130, %v123
  %v132 = vpop.permute.xlu0 %131
  %v135 = vsel %vm57, %v120, 0
  %v138 = vsel %vm57, %v121, 0
  %140 = vmatpush.msra.mxu0 0.0
  %141 = vmatpush.msra.mxu0 0.0
  %142 = vmatpush.msra.mxu0 0.0
  %143 = vmatpush.msra.mxu0 0.0
  %144 = vmatpush.msra.mxu0 0.0
  %145 = vmatpush.msra.mxu0 0.0
  %146 = vmatpush.msra.mxu0 0.0
  %147 = vmatpush.msra.mxu0 0.0
  %148 = vmatpush.msra.mxu0 0.0
  %149 = vmatpush.msra.mxu0 0.0
  %150 = vmatpush.msra.mxu0 0.0
  %151 = vmatpush.msra.mxu0 0.0
  %152 = vmatpush.msra.mxu0 0.0
  %153 = vmatpush.msra.mxu0 0.0
  %154 = vmatpush.msra.mxu0 %v119
  %155 = vmatpush.msra.mxu0 %v118
  %156 = vmatmul.f32.gmra.mxu0 %v135
  %v157 = vpop.f32.mrf.mxu0
  %v158 = vadd.f32 %v127, %v157
  %159 = vmatmul.f32.gmra.mxu0 %v138
  %v160 = vpop.f32.mrf.mxu0
  %v161 = vadd.f32 %v132, %v160
  %162 = vdwg.mxu0
  %vm163 = vcmp.ge.f32.partialorder %v158, 0.0
  %vm164 = vcmp.ge.f32.partialorder %v161, 0.0
  %v165 = vmul.f32 %v158, 0.1
  %v166 = vmul.f32 %v161, 0.1
  %v167 = vsel %vm163, %v158, %v165
  %v168 = vsel %vm164, %v161, %v166
  %169 = vst [vmem:[%s6] sm:$0xff] %v167
  %170 = vst [vmem:[%s6 + $0x8] sm:$0xff] %v168
  // Predicated region
  $region26: #{spatial_attention_forward.12} parent=0 // pred_check
    _
  $region27: #{spatial_attention_forward.12} parent=0 // pred_check_branch
    %172 = sbr.rel (0) target = $region29
  $region28: #{spatial_attention_forward.12} parent=0 // pred_region
    _
  $region29: #{spatial_attention_forward.12} parent=0 // pred_fallthru
    _
  // Predicated region
  $region30: #{spatial_attention_forward.12} parent=0 // pred_check
    _
  $region31: #{spatial_attention_forward.12} parent=0 // pred_check_branch
    %174 = sbr.rel (0) target = $region33
  $region32: #{spatial_attention_forward.12} parent=0 // pred_region
    _
  $region33: #{spatial_attention_forward.12} parent=0 // pred_fallthru
    _

// kernel: spatial_attention_forward.13
$region0: #{spatial_attention_forward.13}
  #allocation0 [shape = 'u32[]', space=smem, size = 0x4, offset = 0x4, fixed_abs, tag = 'smem constant byte address 0x4 - core index']
  #allocation1 [shape = 'u32[72,128]{1,0:T(1,128)}', space=vmem, size = 0x9000, scoped, tag = 'internal scratch']
  %s0 = inlined_call_operand.vmem [shape: f32[144,512], index: 0, kind: input, shape index: {}]
  %s1 = inlined_call_operand.vmem [shape: f32[16,512], index: 1, kind: input, shape index: {}]
  %s2 = inlined_call_operand.vmem [shape: f32[16,144], index: 2, kind: input, shape index: {}]
  %s3 = inlined_call_operand.vmem [shape: f32[16,1], index: 3, kind: input, shape index: {}]
  %s4 = inlined_call_operand.vmem [shape: f32[16,16], index: 4, kind: input, shape index: {}]
  %s5 = inlined_call_operand.vmem [shape: f32[16,1], index: 5, kind: input, shape index: {}]
  %s6 = inlined_call_operand.vmem [shape: f32[16,16], index: 6, kind: input, shape index: {}]
  %s7 = inlined_call_operand.vmem [shape: f32[16,1], index: 7, kind: input, shape index: {}]
  %s8 = inlined_call_operand.vmem [shape: f32[16,512], index: 8, kind: output, shape index: {}]
  %s9 = sld [smem:[#allocation0]]
  $region42: #{spatial_attention_forward.13} parent=0
    _
  %s11 = ssub.s32 1, %s9
  %s12 = scalar_select 0, %s11, %s9
  // Predicated region
  $region2: #{spatial_attention_forward.13} parent=0 // pred_check
    _
  $region3: #{spatial_attention_forward.13} parent=0 // pred_check_branch
    %14 = sbr.rel (0) target = $region5
  $region4: #{spatial_attention_forward.13} parent=0 // pred_region
    _
  $region5: #{spatial_attention_forward.13} parent=0 // pred_fallthru
    _
  // Predicated region
  $region6: #{spatial_attention_forward.13} parent=0 // pred_check
    _
  $region7: #{spatial_attention_forward.13} parent=0 // pred_check_branch
    %16 = sbr.rel (0) target = $region9
  $region8: #{spatial_attention_forward.13} parent=0 // pred_region
    _
  $region9: #{spatial_attention_forward.13} parent=0 // pred_fallthru
    _
  // Predicated region
  $region10: #{spatial_attention_forward.13} parent=0 // pred_check
    _
  $region11: #{spatial_attention_forward.13} parent=0 // pred_check_branch
    %18 = sbr.rel (0) target = $region13
  $region12: #{spatial_attention_forward.13} parent=0 // pred_region
    _
  $region13: #{spatial_attention_forward.13} parent=0 // pred_fallthru
    _
  // Predicated region
  $region14: #{spatial_attention_forward.13} parent=0 // pred_check
    _
  $region15: #{spatial_attention_forward.13} parent=0 // pred_check_branch
    %20 = sbr.rel (0) target = $region17
  $region16: #{spatial_attention_forward.13} parent=0 // pred_region
    _
  $region17: #{spatial_attention_forward.13} parent=0 // pred_fallthru
    _
  // Predicated region
  $region18: #{spatial_attention_forward.13} parent=0 // pred_check
    _
  $region19: #{spatial_attention_forward.13} parent=0 // pred_check_branch
    %22 = sbr.rel (0) target = $region21
  $region20: #{spatial_attention_forward.13} parent=0 // pred_region
    _
  $region21: #{spatial_attention_forward.13} parent=0 // pred_fallthru
    _
  // Predicated region
  $region22: #{spatial_attention_forward.13} parent=0 // pred_check
    _
  $region23: #{spatial_attention_forward.13} parent=0 // pred_check_branch
    %24 = sbr.rel (0) target = $region25
  $region24: #{spatial_attention_forward.13} parent=0 // pred_region
    _
  $region25: #{spatial_attention_forward.13} parent=0 // pred_fallthru
    _
  // Predicated region
  $region26: #{spatial_attention_forward.13} parent=0 // pred_check
    _
  $region27: #{spatial_attention_forward.13} parent=0 // pred_check_branch
    %26 = sbr.rel (0) target = $region29
  $region28: #{spatial_attention_forward.13} parent=0 // pred_region
    _
  $region29: #{spatial_attention_forward.13} parent=0 // pred_fallthru
    _
  // Predicated region
  $region30: #{spatial_attention_forward.13} parent=0 // pred_check
    _
  $region31: #{spatial_attention_forward.13} parent=0 // pred_check_branch
    %28 = sbr.rel (0) target = $region33
  $region32: #{spatial_attention_forward.13} parent=0 // pred_region
    _
  $region33: #{spatial_attention_forward.13} parent=0 // pred_fallthru
    _
  %v29 = vld [vmem:[%s2] sm:$0xff]
  %v30 = vld [vmem:[%s2 + $0x8] sm:$0xff]
  %v31 = vld [vmem:[%s2 + $0x10] sm:$0xff]
  %v32 = vld [vmem:[%s2 + $0x18] sm:$0xff]
  %v33 = vld [vmem:[%s0] sm:$0xff]
  %v34 = vld [vmem:[%s0 + $0x8] sm:$0xff]
  %v35 = vld [vmem:[%s0 + $0x10] sm:$0xff]
  %v36 = vld [vmem:[%s0 + $0x18] sm:$0xff]
  %v37 = vld [vmem:[%s0 + $0x20] sm:$0xff]
  %v38 = vld [vmem:[%s0 + $0x28] sm:$0xff]
  %v39 = vld [vmem:[%s0 + $0x30] sm:$0xff]
  %v40 = vld [vmem:[%s0 + $0x38] sm:$0xff]
  %v41 = vld [vmem:[%s0 + $0x40] sm:$0xff]
  %v42 = vld [vmem:[%s0 + $0x48] sm:$0xff]
  %v43 = vld [vmem:[%s0 + $0x50] sm:$0xff]
  %v44 = vld [vmem:[%s0 + $0x58] sm:$0xff]
  %v45 = vld [vmem:[%s0 + $0x60] sm:$0xff]
  %v46 = vld [vmem:[%s0 + $0x68] sm:$0xff]
  %v47 = vld [vmem:[%s0 + $0x70] sm:$0xff]
  %v48 = vld [vmem:[%s0 + $0x78] sm:$0xff]
  %v49 = vld [vmem:[%s0 + $0x80] sm:$0xff]
  %v50 = vld [vmem:[%s0 + $0x88] sm:$0xff]
  %v51 = vld [vmem:[%s0 + $0x90] sm:$0xff]
  %v52 = vld [vmem:[%s0 + $0x98] sm:$0xff]
  %v53 = vld [vmem:[%s0 + $0xa0] sm:$0xff]
  %v54 = vld [vmem:[%s0 + $0xa8] sm:$0xff]
  %v55 = vld [vmem:[%s0 + $0xb0] sm:$0xff]
  %v56 = vld [vmem:[%s0 + $0xb8] sm:$0xff]
  %v57 = vld [vmem:[%s0 + $0xc0] sm:$0xff]
  %v58 = vld [vmem:[%s0 + $0xc8] sm:$0xff]
  %v59 = vld [vmem:[%s0 + $0xd0] sm:$0xff]
  %v60 = vld [vmem:[%s0 + $0xd8] sm:$0xff]
  %v61 = vld [vmem:[%s0 + $0xe0] sm:$0xff]
  %v62 = vld [vmem:[%s0 + $0xe8] sm:$0xff]
  %v63 = vld [vmem:[%s0 + $0xf0] sm:$0xff]
  %v64 = vld [vmem:[%s0 + $0xf8] sm:$0xff]
  %v65 = vld [vmem:[%s0 + $0x100] sm:$0xff]
  %v66 = vld [vmem:[%s0 + $0x108] sm:$0xff]
  %v67 = vld [vmem:[%s0 + $0x110] sm:$0xff]
  %v68 = vld [vmem:[%s0 + $0x118] sm:$0xff]
  %v69 = vld [vmem:[%s0 + $0x120] sm:$0xff]
  %v70 = vld [vmem:[%s0 + $0x128] sm:$0xff]
  %v71 = vld [vmem:[%s0 + $0x130] sm:$0xff]
  %v72 = vld [vmem:[%s0 + $0x138] sm:$0xff]
  %v73 = vld [vmem:[%s0 + $0x140] sm:$0xff]
  %v74 = vld [vmem:[%s0 + $0x148] sm:$0xff]
  %v75 = vld [vmem:[%s0 + $0x150] sm:$0xff]
  %v76 = vld [vmem:[%s0 + $0x158] sm:$0xff]
  %v77 = vld [vmem:[%s0 + $0x160] sm:$0xff]
  %v78 = vld [vmem:[%s0 + $0x168] sm:$0xff]
  %v79 = vld [vmem:[%s0 + $0x170] sm:$0xff]
  %v80 = vld [vmem:[%s0 + $0x178] sm:$0xff]
  %v81 = vld [vmem:[%s0 + $0x180] sm:$0xff]
  %v82 = vld [vmem:[%s0 + $0x188] sm:$0xff]
  %v83 = vld [vmem:[%s0 + $0x190] sm:$0xff]
  %v84 = vld [vmem:[%s0 + $0x198] sm:$0xff]
  %v85 = vld [vmem:[%s0 + $0x1a0] sm:$0xff]
  %v86 = vld [vmem:[%s0 + $0x1a8] sm:$0xff]
  %v87 = vld [vmem:[%s0 + $0x1b0] sm:$0xff]
  %v88 = vld [vmem:[%s0 + $0x1b8] sm:$0xff]
  %v89 = vld [vmem:[%s0 + $0x1c0] sm:$0xff]
  %v90 = vld [vmem:[%s0 + $0x1c8] sm:$0xff]
  %v91 = vld [vmem:[%s0 + $0x1d0] sm:$0xff]
  %v92 = vld [vmem:[%s0 + $0x1d8] sm:$0xff]
  %v93 = vld [vmem:[%s0 + $0x1e0] sm:$0xff]
  %v94 = vld [vmem:[%s0 + $0x1e8] sm:$0xff]
  %v95 = vld [vmem:[%s0 + $0x1f0] sm:$0xff]
  %v96 = vld [vmem:[%s0 + $0x1f8] sm:$0xff]
  %v97 = vld [vmem:[%s0 + $0x200] sm:$0xff]
  %v98 = vld [vmem:[%s0 + $0x208] sm:$0xff]
  %v99 = vld [vmem:[%s0 + $0x210] sm:$0xff]
  %v100 = vld [vmem:[%s0 + $0x218] sm:$0xff]
  %v101 = vld [vmem:[%s0 + $0x220] sm:$0xff]
  %v102 = vld [vmem:[%s0 + $0x228] sm:$0xff]
  %v103 = vld [vmem:[%s0 + $0x230] sm:$0xff]
  %v104 = vld [vmem:[%s0 + $0x238] sm:$0xff]
  %v105 = vld [vmem:[%s3] sm:$0xff]
  %v106 = vld [vmem:[%s3 + $0x8] sm:$0xff]
  %108 = vset.pattern.permute.xlu0 0
  %109 = vperm.xlu0 %108, %v105
  %v110 = vpop.permute.xlu0 %109
  %113 = vset.pattern.permute.xlu0 0
  %114 = vperm.xlu0 %113, %v106
  %v115 = vpop.permute.xlu0 %114
  %vm117 = vcmask 130048
  %v119 = vsel %vm117, %v30, 0
  %v122 = vsel %vm117, %v32, 0
  %124 = vmatpush.msra.mxu0 %v93
  %125 = vmatpush.msra.mxu0 %v89
  %126 = vmatpush.msra.mxu0 %v85
  %127 = vmatpush.msra.mxu0 %v81
  %128 = vmatpush.msra.mxu0 %v77
  %129 = vmatpush.msra.mxu0 %v73
  %130 = vmatpush.msra.mxu0 %v69
  %131 = vmatpush.msra.mxu0 %v65
  %132 = vmatpush.msra.mxu0 %v61
  %133 = vmatpush.msra.mxu0 %v57
  %134 = vmatpush.msra.mxu0 %v53
  %135 = vmatpush.msra.mxu0 %v49
  %136 = vmatpush.msra.mxu0 %v45
  %137 = vmatpush.msra.mxu0 %v41
  %138 = vmatpush.msra.mxu0 %v37
  %139 = vmatpush.msra.mxu0 %v33
  %140 = vmatmul.f32.gmra.mxu0 %v29
  %v141 = vpop.f32.mrf.mxu0
  %v142 = vadd.f32 %v110, %v141
  %143 = vmatmul.f32.gmra.mxu0 %v31
  %v144 = vpop.f32.mrf.mxu0
  %v145 = vadd.f32 %v115, %v144
  %146 = vdwg.mxu0
  %147 = vmatpush.msra.mxu0 0.0
  %148 = vmatpush.msra.mxu0 0.0
  %149 = vmatpush.msra.mxu0 0.0
  %150 = vmatpush.msra.mxu0 0.0
  %151 = vmatpush.msra.mxu0 0.0
  %152 = vmatpush.msra.mxu0 0.0
  %153 = vmatpush.msra.mxu0 0.0
  %154 = vmatpush.msra.mxu0 0.0
  %155 = vmatpush.msra.mxu0 0.0
  %156 = vmatpush.msra.mxu0 0.0
  %157 = vmatpush.msra.mxu0 0.0
  %158 = vmatpush.msra.mxu0 0.0
  %159 = vmatpush.msra.mxu0 0.0
  %160 = vmatpush.msra.mxu0 0.0
  %161 = vmatpush.msra.mxu0 %v101
  %162 = vmatpush.msra.mxu0 %v97
  %163 = vmatmul.f32.gmra.mxu0 %v119
  %v164 = vpop.f32.mrf.mxu0
  %v165 = vadd.f32 %v142, %v164
  %166 = vmatmul.f32.gmra.mxu0 %v122
  %v167 = vpop.f32.mrf.mxu0
  %v168 = vadd.f32 %v145, %v167
  %169 = vdwg.mxu0
  %170 = vmatpush.msra.mxu0 %v94
  %171 = vmatpush.msra.mxu0 %v90
  %172 = vmatpush.msra.mxu0 %v86
  %173 = vmatpush.msra.mxu0 %v82
  %174 = vmatpush.msra.mxu0 %v78
  %175 = vmatpush.msra.mxu0 %v74
  %176 = vmatpush.msra.mxu0 %v70
  %177 = vmatpush.msra.mxu0 %v66
  %178 = vmatpush.msra.mxu0 %v62
  %179 = vmatpush.msra.mxu0 %v58
  %180 = vmatpush.msra.mxu0 %v54
  %181 = vmatpush.msra.mxu0 %v50
  %182 = vmatpush.msra.mxu0 %v46
  %183 = vmatpush.msra.mxu0 %v42
  %184 = vmatpush.msra.mxu0 %v38
  %185 = vmatpush.msra.mxu0 %v34
  %186 = vmatmul.f32.gmra.mxu0 %v29
  %v187 = vpop.f32.mrf.mxu0
  %v188 = vadd.f32 %v110, %v187
  %189 = vmatmul.f32.gmra.mxu0 %v31
  %v190 = vpop.f32.mrf.mxu0
  %v191 = vadd.f32 %v115, %v190
  %192 = vdwg.mxu0
  %193 = vmatpush.msra.mxu0 0.0
  %194 = vmatpush.msra.mxu0 0.0
  %195 = vmatpush.msra.mxu0 0.0
  %196 = vmatpush.msra.mxu0 0.0
  %197 = vmatpush.msra.mxu0 0.0
  %198 = vmatpush.msra.mxu0 0.0
  %199 = vmatpush.msra.mxu0 0.0
  %200 = vmatpush.msra.mxu0 0.0
  %201 = vmatpush.msra.mxu0 0.0
  %202 = vmatpush.msra.mxu0 0.0
  %203 = vmatpush.msra.mxu0 0.0
  %204 = vmatpush.msra.mxu0 0.0
  %205 = vmatpush.msra.mxu0 0.0
  %206 = vmatpush.msra.mxu0 0.0
  %207 = vmatpush.msra.mxu0 %v102
  %208 = vmatpush.msra.mxu0 %v98
  %209 = vmatmul.f32.gmra.mxu0 %v119
  %v210 = vpop.f32.mrf.mxu0
  %v211 = vadd.f32 %v188, %v210
  %212 = vmatmul.f32.gmra.mxu0 %v122
  %v213 = vpop.f32.mrf.mxu0
  %v214 = vadd.f32 %v191, %v213
  %215 = vdwg.mxu0
  %216 = vmatpush.msra.mxu0 %v95
  %217 = vmatpush.msra.mxu0 %v91
  %218 = vmatpush.msra.mxu0 %v87
  %219 = vmatpush.msra.mxu0 %v83
  %220 = vmatpush.msra.mxu0 %v79
  %221 = vmatpush.msra.mxu0 %v75
  %222 = vmatpush.msra.mxu0 %v71
  %223 = vmatpush.msra.mxu0 %v67
  %224 = vmatpush.msra.mxu0 %v63
  %225 = vmatpush.msra.mxu0 %v59
  %226 = vmatpush.msra.mxu0 %v55
  %227 = vmatpush.msra.mxu0 %v51
  %228 = vmatpush.msra.mxu0 %v47
  %229 = vmatpush.msra.mxu0 %v43
  %230 = vmatpush.msra.mxu0 %v39
  %231 = vmatpush.msra.mxu0 %v35
  %232 = vmatmul.f32.gmra.mxu0 %v29
  %v233 = vpop.f32.mrf.mxu0
  %v234 = vadd.f32 %v110, %v233
  %235 = vmatmul.f32.gmra.mxu0 %v31
  %v236 = vpop.f32.mrf.mxu0
  %v237 = vadd.f32 %v115, %v236
  %238 = vdwg.mxu0
  %239 = vmatpush.msra.mxu0 0.0
  %240 = vmatpush.msra.mxu0 0.0
  %241 = vmatpush.msra.mxu0 0.0
  %242 = vmatpush.msra.mxu0 0.0
  %243 = vmatpush.msra.mxu0 0.0
  %244 = vmatpush.msra.mxu0 0.0
  %245 = vmatpush.msra.mxu0 0.0
  %246 = vmatpush.msra.mxu0 0.0
  %247 = vmatpush.msra.mxu0 0.0
  %248 = vmatpush.msra.mxu0 0.0
  %249 = vmatpush.msra.mxu0 0.0
  %250 = vmatpush.msra.mxu0 0.0
  %251 = vmatpush.msra.mxu0 0.0
  %252 = vmatpush.msra.mxu0 0.0
  %253 = vmatpush.msra.mxu0 %v103
  %254 = vmatpush.msra.mxu0 %v99
  %255 = vmatmul.f32.gmra.mxu0 %v119
  %v256 = vpop.f32.mrf.mxu0
  %v257 = vadd.f32 %v234, %v256
  %258 = vmatmul.f32.gmra.mxu0 %v122
  %v259 = vpop.f32.mrf.mxu0
  %v260 = vadd.f32 %v237, %v259
  %261 = vdwg.mxu0
  %262 = vmatpush.msra.mxu0 %v96
  %263 = vmatpush.msra.mxu0 %v92
  %264 = vmatpush.msra.mxu0 %v88
  %265 = vmatpush.msra.mxu0 %v84
  %266 = vmatpush.msra.mxu0 %v80
  %267 = vmatpush.msra.mxu0 %v76
  %268 = vmatpush.msra.mxu0 %v72
  %269 = vmatpush.msra.mxu0 %v68
  %270 = vmatpush.msra.mxu0 %v64
  %271 = vmatpush.msra.mxu0 %v60
  %272 = vmatpush.msra.mxu0 %v56
  %273 = vmatpush.msra.mxu0 %v52
  %274 = vmatpush.msra.mxu0 %v48
  %275 = vmatpush.msra.mxu0 %v44
  %276 = vmatpush.msra.mxu0 %v40
  %277 = vmatpush.msra.mxu0 %v36
  %278 = vmatmul.f32.gmra.mxu0 %v29
  %v279 = vpop.f32.mrf.mxu0
  %v280 = vadd.f32 %v110, %v279
  %281 = vmatmul.f32.gmra.mxu0 %v31
  %v282 = vpop.f32.mrf.mxu0
  %v283 = vadd.f32 %v115, %v282
  %284 = vdwg.mxu0
  %285 = vmatpush.msra.mxu0 0.0
  %286 = vmatpush.msra.mxu0 0.0
  %287 = vmatpush.msra.mxu0 0.0
  %288 = vmatpush.msra.mxu0 0.0
  %289 = vmatpush.msra.mxu0 0.0
  %290 = vmatpush.msra.mxu0 0.0
  %291 = vmatpush.msra.mxu0 0.0
  %292 = vmatpush.msra.mxu0 0.0
  %293 = vmatpush.msra.mxu0 0.0
  %294 = vmatpush.msra.mxu0 0.0
  %295 = vmatpush.msra.mxu0 0.0
  %296 = vmatpush.msra.mxu0 0.0
  %297 = vmatpush.msra.mxu0 0.0
  %298 = vmatpush.msra.mxu0 0.0
  %299 = vmatpush.msra.mxu0 %v104
  %300 = vmatpush.msra.mxu0 %v100
  %301 = vmatmul.f32.gmra.mxu0 %v119
  %v302 = vpop.f32.mrf.mxu0
  %v303 = vadd.f32 %v280, %v302
  %304 = vmatmul.f32.gmra.mxu0 %v122
  %v305 = vpop.f32.mrf.mxu0
  %v306 = vadd.f32 %v283, %v305
  %307 = vdwg.mxu0
  %v308 = vld [vmem:[%s4] sm:$0xff]
  %v309 = vld [vmem:[%s4 + $0x8] sm:$0xff]
  %v310 = vld [vmem:[%s5] sm:$0xff]
  %v311 = vld [vmem:[%s5 + $0x8] sm:$0xff]
  %313 = vset.pattern.permute.xlu0 0
  %314 = vperm.xlu0 %313, %v310
  %v315 = vpop.permute.xlu0 %314
  %318 = vset.pattern.permute.xlu0 0
  %319 = vperm.xlu0 %318, %v311
  %v320 = vpop.permute.xlu0 %319
  %v323 = vsel %vm117, %v308, 0
  %v326 = vsel %vm117, %v309, 0
  %328 = vmatpush.msra.mxu0 0.0
  %329 = vmatpush.msra.mxu0 0.0
  %330 = vmatpush.msra.mxu0 0.0
  %331 = vmatpush.msra.mxu0 0.0
  %332 = vmatpush.msra.mxu0 0.0
  %333 = vmatpush.msra.mxu0 0.0
  %334 = vmatpush.msra.mxu0 0.0
  %335 = vmatpush.msra.mxu0 0.0
  %336 = vmatpush.msra.mxu0 0.0
  %337 = vmatpush.msra.mxu0 0.0
  %338 = vmatpush.msra.mxu0 0.0
  %339 = vmatpush.msra.mxu0 0.0
  %340 = vmatpush.msra.mxu0 0.0
  %341 = vmatpush.msra.mxu0 0.0
  %342 = vmatpush.msra.mxu0 %v168
  %343 = vmatpush.msra.mxu0 %v165
  %344 = vmatmul.f32.gmra.mxu0 %v323
  %v345 = vpop.f32.mrf.mxu0
  %v346 = vadd.f32 %v315, %v345
  %347 = vmatmul.f32.gmra.mxu0 %v326
  %v348 = vpop.f32.mrf.mxu0
  %v349 = vadd.f32 %v320, %v348
  %350 = vdwg.mxu0
  %351 = vmatpush.msra.mxu0 0.0
  %352 = vmatpush.msra.mxu0 0.0
  %353 = vmatpush.msra.mxu0 0.0
  %354 = vmatpush.msra.mxu0 0.0
  %355 = vmatpush.msra.mxu0 0.0
  %356 = vmatpush.msra.mxu0 0.0
  %357 = vmatpush.msra.mxu0 0.0
  %358 = vmatpush.msra.mxu0 0.0
  %359 = vmatpush.msra.mxu0 0.0
  %360 = vmatpush.msra.mxu0 0.0
  %361 = vmatpush.msra.mxu0 0.0
  %362 = vmatpush.msra.mxu0 0.0
  %363 = vmatpush.msra.mxu0 0.0
  %364 = vmatpush.msra.mxu0 0.0
  %365 = vmatpush.msra.mxu0 %v214
  %366 = vmatpush.msra.mxu0 %v211
  %367 = vmatmul.f32.gmra.mxu0 %v323
  %v368 = vpop.f32.mrf.mxu0
  %v369 = vadd.f32 %v315, %v368
  %370 = vmatmul.f32.gmra.mxu0 %v326
  %v371 = vpop.f32.mrf.mxu0
  %v372 = vadd.f32 %v320, %v371
  %373 = vdwg.mxu0
  %374 = vmatpush.msra.mxu0 0.0
  %375 = vmatpush.msra.mxu0 0.0
  %376 = vmatpush.msra.mxu0 0.0
  %377 = vmatpush.msra.mxu0 0.0
  %378 = vmatpush.msra.mxu0 0.0
  %379 = vmatpush.msra.mxu0 0.0
  %380 = vmatpush.msra.mxu0 0.0
  %381 = vmatpush.msra.mxu0 0.0
  %382 = vmatpush.msra.mxu0 0.0
  %383 = vmatpush.msra.mxu0 0.0
  %384 = vmatpush.msra.mxu0 0.0
  %385 = vmatpush.msra.mxu0 0.0
  %386 = vmatpush.msra.mxu0 0.0
  %387 = vmatpush.msra.mxu0 0.0
  %388 = vmatpush.msra.mxu0 %v260
  %389 = vmatpush.msra.mxu0 %v257
  %390 = vmatmul.f32.gmra.mxu0 %v323
  %v391 = vpop.f32.mrf.mxu0
  %v392 = vadd.f32 %v315, %v391
  %393 = vmatmul.f32.gmra.mxu0 %v326
  %v394 = vpop.f32.mrf.mxu0
  %v395 = vadd.f32 %v320, %v394
  %396 = vdwg.mxu0
  %397 = vmatpush.msra.mxu0 0.0
  %398 = vmatpush.msra.mxu0 0.0
  %399 = vmatpush.msra.mxu0 0.0
  %400 = vmatpush.msra.mxu0 0.0
  %401 = vmatpush.msra.mxu0 0.0
  %402 = vmatpush.msra.mxu0 0.0
  %403 = vmatpush.msra.mxu0 0.0
  %404 = vmatpush.msra.mxu0 0.0
  %405 = vmatpush.msra.mxu0 0.0
  %406 = vmatpush.msra.mxu0 0.0
  %407 = vmatpush.msra.mxu0 0.0
  %408 = vmatpush.msra.mxu0 0.0
  %409 = vmatpush.msra.mxu0 0.0
  %410 = vmatpush.msra.mxu0 0.0
  %411 = vmatpush.msra.mxu0 %v306
  %412 = vmatpush.msra.mxu0 %v303
  %413 = vmatmul.f32.gmra.mxu0 %v323
  %v414 = vpop.f32.mrf.mxu0
  %v415 = vadd.f32 %v315, %v414
  %416 = vmatmul.f32.gmra.mxu0 %v326
  %v417 = vpop.f32.mrf.mxu0
  %v418 = vadd.f32 %v320, %v417
  %419 = vdwg.mxu0
  %vm420 = vcmp.ge.f32.partialorder %v346, 0.0
  %vm421 = vcmp.ge.f32.partialorder %v369, 0.0
  %vm422 = vcmp.ge.f32.partialorder %v392, 0.0
  %vm423 = vcmp.ge.f32.partialorder %v415, 0.0
  %vm424 = vcmp.ge.f32.partialorder %v349, 0.0
  %vm425 = vcmp.ge.f32.partialorder %v372, 0.0
  %vm426 = vcmp.ge.f32.partialorder %v395, 0.0
  %vm427 = vcmp.ge.f32.partialorder %v418, 0.0
  %v428 = vmul.f32 %v346, 0.1
  %v429 = vmul.f32 %v369, 0.1
  %v430 = vmul.f32 %v392, 0.1
  %v431 = vmul.f32 %v415, 0.1
  %v432 = vmul.f32 %v349, 0.1
  %v433 = vmul.f32 %v372, 0.1
  %v434 = vmul.f32 %v395, 0.1
  %v435 = vmul.f32 %v418, 0.1
  %v436 = vsel %vm420, %v346, %v428
  %v437 = vsel %vm421, %v369, %v429
  %v438 = vsel %vm422, %v392, %v430
  %v439 = vsel %vm423, %v415, %v431
  %v440 = vsel %vm424, %v349, %v432
  %v441 = vsel %vm425, %v372, %v433
  %v442 = vsel %vm426, %v395, %v434
  %v443 = vsel %vm427, %v418, %v435
  %v444 = vld [vmem:[%s6] sm:$0xff]
  %v445 = vld [vmem:[%s6 + $0x8] sm:$0xff]
  %v446 = vld [vmem:[%s7] sm:$0xff]
  %v447 = vld [vmem:[%s7 + $0x8] sm:$0xff]
  %449 = vset.pattern.permute.xlu0 0
  %450 = vperm.xlu0 %449, %v446
  %v451 = vpop.permute.xlu0 %450
  %454 = vset.pattern.permute.xlu0 0
  %455 = vperm.xlu0 %454, %v447
  %v456 = vpop.permute.xlu0 %455
  %v459 = vsel %vm117, %v444, 0
  %v462 = vsel %vm117, %v445, 0
  %464 = vmatpush.msra.mxu0 0.0
  %465 = vmatpush.msra.mxu0 0.0
  %466 = vmatpush.msra.mxu0 0.0
  %467 = vmatpush.msra.mxu0 0.0
  %468 = vmatpush.msra.mxu0 0.0
  %469 = vmatpush.msra.mxu0 0.0
  %470 = vmatpush.msra.mxu0 0.0
  %471 = vmatpush.msra.mxu0 0.0
  %472 = vmatpush.msra.mxu0 0.0
  %473 = vmatpush.msra.mxu0 0.0
  %474 = vmatpush.msra.mxu0 0.0
  %475 = vmatpush.msra.mxu0 0.0
  %476 = vmatpush.msra.mxu0 0.0
  %477 = vmatpush.msra.mxu0 0.0
  %478 = vmatpush.msra.mxu0 %v440
  %479 = vmatpush.msra.mxu0 %v436
  %480 = vmatmul.f32.gmra.mxu0 %v459
  %v481 = vpop.f32.mrf.mxu0
  %v482 = vadd.f32 %v451, %v481
  %483 = vmatmul.f32.gmra.mxu0 %v462
  %v484 = vpop.f32.mrf.mxu0
  %v485 = vadd.f32 %v456, %v484
  %486 = vdwg.mxu0
  %487 = vmatpush.msra.mxu0 0.0
  %488 = vmatpush.msra.mxu0 0.0
  %489 = vmatpush.msra.mxu0 0.0
  %490 = vmatpush.msra.mxu0 0.0
  %491 = vmatpush.msra.mxu0 0.0
  %492 = vmatpush.msra.mxu0 0.0
  %493 = vmatpush.msra.mxu0 0.0
  %494 = vmatpush.msra.mxu0 0.0
  %495 = vmatpush.msra.mxu0 0.0
  %496 = vmatpush.msra.mxu0 0.0
  %497 = vmatpush.msra.mxu0 0.0
  %498 = vmatpush.msra.mxu0 0.0
  %499 = vmatpush.msra.mxu0 0.0
  %500 = vmatpush.msra.mxu0 0.0
  %501 = vmatpush.msra.mxu0 %v441
  %502 = vmatpush.msra.mxu0 %v437
  %503 = vmatmul.f32.gmra.mxu0 %v459
  %v504 = vpop.f32.mrf.mxu0
  %v505 = vadd.f32 %v451, %v504
  %506 = vmatmul.f32.gmra.mxu0 %v462
  %v507 = vpop.f32.mrf.mxu0
  %v508 = vadd.f32 %v456, %v507
  %509 = vdwg.mxu0
  %510 = vmatpush.msra.mxu0 0.0
  %511 = vmatpush.msra.mxu0 0.0
  %512 = vmatpush.msra.mxu0 0.0
  %513 = vmatpush.msra.mxu0 0.0
  %514 = vmatpush.msra.mxu0 0.0
  %515 = vmatpush.msra.mxu0 0.0
  %516 = vmatpush.msra.mxu0 0.0
  %517 = vmatpush.msra.mxu0 0.0
  %518 = vmatpush.msra.mxu0 0.0
  %519 = vmatpush.msra.mxu0 0.0
  %520 = vmatpush.msra.mxu0 0.0
  %521 = vmatpush.msra.mxu0 0.0
  %522 = vmatpush.msra.mxu0 0.0
  %523 = vmatpush.msra.mxu0 0.0
  %524 = vmatpush.msra.mxu0 %v442
  %525 = vmatpush.msra.mxu0 %v438
  %526 = vmatmul.f32.gmra.mxu0 %v459
  %v527 = vpop.f32.mrf.mxu0
  %v528 = vadd.f32 %v451, %v527
  %529 = vmatmul.f32.gmra.mxu0 %v462
  %v530 = vpop.f32.mrf.mxu0
  %v531 = vadd.f32 %v456, %v530
  %532 = vdwg.mxu0
  %533 = vmatpush.msra.mxu0 0.0
  %534 = vmatpush.msra.mxu0 0.0
  %535 = vmatpush.msra.mxu0 0.0
  %536 = vmatpush.msra.mxu0 0.0
  %537 = vmatpush.msra.mxu0 0.0
  %538 = vmatpush.msra.mxu0 0.0
  %539 = vmatpush.msra.mxu0 0.0
  %540 = vmatpush.msra.mxu0 0.0
  %541 = vmatpush.msra.mxu0 0.0
  %542 = vmatpush.msra.mxu0 0.0
  %543 = vmatpush.msra.mxu0 0.0
  %544 = vmatpush.msra.mxu0 0.0
  %545 = vmatpush.msra.mxu0 0.0
  %546 = vmatpush.msra.mxu0 0.0
  %547 = vmatpush.msra.mxu0 %v443
  %548 = vmatpush.msra.mxu0 %v439
  %549 = vmatmul.f32.gmra.mxu0 %v459
  %v550 = vpop.f32.mrf.mxu0
  %v551 = vadd.f32 %v451, %v550
  %552 = vmatmul.f32.gmra.mxu0 %v462
  %v553 = vpop.f32.mrf.mxu0
  %v554 = vadd.f32 %v456, %v553
  %555 = vdwg.mxu0
  %v556 = vld [vmem:[%s1] sm:$0xff]
  %v557 = vld [vmem:[%s1 + $0x8] sm:$0xff]
  %v558 = vld [vmem:[%s1 + $0x10] sm:$0xff]
  %v559 = vld [vmem:[%s1 + $0x18] sm:$0xff]
  %v560 = vld [vmem:[%s1 + $0x20] sm:$0xff]
  %v561 = vld [vmem:[%s1 + $0x28] sm:$0xff]
  %v562 = vld [vmem:[%s1 + $0x30] sm:$0xff]
  %v563 = vld [vmem:[%s1 + $0x38] sm:$0xff]
  %v564 = vxor.u32 %v165, 2147483648
  %v565 = vxor.u32 %v211, 2147483648
  %v566 = vxor.u32 %v257, 2147483648
  %v567 = vxor.u32 %v303, 2147483648
  %v568 = vxor.u32 %v168, 2147483648
  %v569 = vxor.u32 %v214, 2147483648
  %v570 = vxor.u32 %v260, 2147483648
  %v571 = vxor.u32 %v306, 2147483648
  %v572 = vmul.f32 %v564, 1.442695
  %v573 = vpow.pop %v572
  %v574 = vmul.f32 %v565, 1.442695
  %v575 = vpow.pop %v574
  %v576 = vmul.f32 %v566, 1.442695
  %v577 = vpow.pop %v576
  %v578 = vmul.f32 %v567, 1.442695
  %v579 = vpow.pop %v578
  %v580 = vmul.f32 %v568, 1.442695
  %v581 = vpow.pop %v580
  %v582 = vmul.f32 %v569, 1.442695
  %v583 = vpow.pop %v582
  %v584 = vmul.f32 %v570, 1.442695
  %v585 = vpow.pop %v584
  %v586 = vmul.f32 %v571, 1.442695
  %v587 = vpow.pop %v586
  %v588 = vadd.f32 %v573, 1.0
  %v589 = vadd.f32 %v575, 1.0
  %v590 = vadd.f32 %v577, 1.0
  %v591 = vadd.f32 %v579, 1.0
  %v592 = vadd.f32 %v581, 1.0
  %v593 = vadd.f32 %v583, 1.0
  %v594 = vadd.f32 %v585, 1.0
  %v595 = vadd.f32 %v587, 1.0
  %v596 = vrcp.pop %v588
  %v597 = vmul.f32 %v588, %v596
  %v598 = vsub.f32 1.0, %v597
  %v599 = vmul.f32 %v596, %v598
  %v600 = vadd.f32 %v596, %v599
  %vm601 = vweird.f32 %v588
  %vm602 = vweird.f32 %v596
  %vm603 = vmor %vm601, %vm602
  %v604 = vsel %vm603, %v596, %v600
  %v605 = vand.u32 2147483647, %v588
  %vm606 = vcmp.eq.f32.partialorder %v605, 8.507059e+37
  %v607 = vand.u32 %v588, 2147483648
  %v608 = vor.u32 1.1754944e-38, %v607
  %v609 = vsel %vm606, %v608, %v604
  %v610 = vmul.f32 1.0, %v609
  %v611 = vrcp.pop %v589
  %v612 = vmul.f32 %v589, %v611
  %v613 = vsub.f32 1.0, %v612
  %v614 = vmul.f32 %v611, %v613
  %v615 = vadd.f32 %v611, %v614
  %vm616 = vweird.f32 %v589
  %vm617 = vweird.f32 %v611
  %vm618 = vmor %vm616, %vm617
  %v619 = vsel %vm618, %v611, %v615
  %v620 = vand.u32 2147483647, %v589
  %vm621 = vcmp.eq.f32.partialorder %v620, 8.507059e+37
  %v622 = vand.u32 %v589, 2147483648
  %v623 = vor.u32 1.1754944e-38, %v622
  %v624 = vsel %vm621, %v623, %v619
  %v625 = vmul.f32 1.0, %v624
  %v626 = vrcp.pop %v590
  %v627 = vmul.f32 %v590, %v626
  %v628 = vsub.f32 1.0, %v627
  %v629 = vmul.f32 %v626, %v628
  %v630 = vadd.f32 %v626, %v629
  %vm631 = vweird.f32 %v590
  %vm632 = vweird.f32 %v626
  %vm633 = vmor %vm631, %vm632
  %v634 = vsel %vm633, %v626, %v630
  %v635 = vand.u32 2147483647, %v590
  %vm636 = vcmp.eq.f32.partialorder %v635, 8.507059e+37
  %v637 = vand.u32 %v590, 2147483648
  %v638 = vor.u32 1.1754944e-38, %v637
  %v639 = vsel %vm636, %v638, %v634
  %v640 = vmul.f32 1.0, %v639
  %v641 = vrcp.pop %v591
  %v642 = vmul.f32 %v591, %v641
  %v643 = vsub.f32 1.0, %v642
  %v644 = vmul.f32 %v641, %v643
  %v645 = vadd.f32 %v641, %v644
  %vm646 = vweird.f32 %v591
  %vm647 = vweird.f32 %v641
  %vm648 = vmor %vm646, %vm647
  %v649 = vsel %vm648, %v641, %v645
  %v650 = vand.u32 2147483647, %v591
  %vm651 = vcmp.eq.f32.partialorder %v650, 8.507059e+37
  %v652 = vand.u32 %v591, 2147483648
  %v653 = vor.u32 1.1754944e-38, %v652
  %v654 = vsel %vm651, %v653, %v649
  %v655 = vmul.f32 1.0, %v654
  %v656 = vrcp.pop %v592
  %v657 = vmul.f32 %v592, %v656
  %v658 = vsub.f32 1.0, %v657
  %v659 = vmul.f32 %v656, %v658
  %v660 = vadd.f32 %v656, %v659
  %vm661 = vweird.f32 %v592
  %vm662 = vweird.f32 %v656
  %vm663 = vmor %vm661, %vm662
  %v664 = vsel %vm663, %v656, %v660
  %v665 = vand.u32 2147483647, %v592
  %vm666 = vcmp.eq.f32.partialorder %v665, 8.507059e+37
  %v667 = vand.u32 %v592, 2147483648
  %v668 = vor.u32 1.1754944e-38, %v667
  %v669 = vsel %vm666, %v668, %v664
  %v670 = vmul.f32 1.0, %v669
  %v671 = vrcp.pop %v593
  %v672 = vmul.f32 %v593, %v671
  %v673 = vsub.f32 1.0, %v672
  %v674 = vmul.f32 %v671, %v673
  %v675 = vadd.f32 %v671, %v674
  %vm676 = vweird.f32 %v593
  %vm677 = vweird.f32 %v671
  %vm678 = vmor %vm676, %vm677
  %v679 = vsel %vm678, %v671, %v675
  %v680 = vand.u32 2147483647, %v593
  %vm681 = vcmp.eq.f32.partialorder %v680, 8.507059e+37
  %v682 = vand.u32 %v593, 2147483648
  %v683 = vor.u32 1.1754944e-38, %v682
  %v684 = vsel %vm681, %v683, %v679
  %v685 = vmul.f32 1.0, %v684
  %v686 = vrcp.pop %v594
  %v687 = vmul.f32 %v594, %v686
  %v688 = vsub.f32 1.0, %v687
  %v689 = vmul.f32 %v686, %v688
  %v690 = vadd.f32 %v686, %v689
  %vm691 = vweird.f32 %v594
  %vm692 = vweird.f32 %v686
  %vm693 = vmor %vm691, %vm692
  %v694 = vsel %vm693, %v686, %v690
  %v695 = vand.u32 2147483647, %v594
  %vm696 = vcmp.eq.f32.partialorder %v695, 8.507059e+37
  %v697 = vand.u32 %v594, 2147483648
  %v698 = vor.u32 1.1754944e-38, %v697
  %v699 = vsel %vm696, %v698, %v694
  %v700 = vmul.f32 1.0, %v699
  %v701 = vrcp.pop %v595
  %v702 = vmul.f32 %v595, %v701
  %v703 = vsub.f32 1.0, %v702
  %v704 = vmul.f32 %v701, %v703
  %v705 = vadd.f32 %v701, %v704
  %vm706 = vweird.f32 %v595
  %vm707 = vweird.f32 %v701
  %vm708 = vmor %vm706, %vm707
  %v709 = vsel %vm708, %v701, %v705
  %v710 = vand.u32 2147483647, %v595
  %vm711 = vcmp.eq.f32.partialorder %v710, 8.507059e+37
  %v712 = vand.u32 %v595, 2147483648
  %v713 = vor.u32 1.1754944e-38, %v712
  %v714 = vsel %vm711, %v713, %v709
  %v715 = vmul.f32 1.0, %v714
  %v716 = vmul.f32 %v556, %v610
  %v717 = vmul.f32 %v557, %v625
  %v718 = vmul.f32 %v558, %v640
  %v719 = vmul.f32 %v559, %v655
  %v720 = vmul.f32 %v560, %v670
  %v721 = vmul.f32 %v561, %v685
  %v722 = vmul.f32 %v562, %v700
  %v723 = vmul.f32 %v563, %v715
  %v724 = vmul.f32 %v716, 2.0
  %v725 = vmul.f32 %v717, 2.0
  %v726 = vmul.f32 %v718, 2.0
  %v727 = vmul.f32 %v719, 2.0
  %v728 = vmul.f32 %v720, 2.0
  %v729 = vmul.f32 %v721, 2.0
  %v730 = vmul.f32 %v722, 2.0
  %v731 = vmul.f32 %v723, 2.0
  %v732 = vadd.f32 %v724, %v482
  %v733 = vadd.f32 %v725, %v505
  %v734 = vadd.f32 %v726, %v528
  %v735 = vadd.f32 %v727, %v551
  %v736 = vadd.f32 %v728, %v485
  %v737 = vadd.f32 %v729, %v508
  %v738 = vadd.f32 %v730, %v531
  %v739 = vadd.f32 %v731, %v554
  %740 = vst [vmem:[%s8] sm:$0xff] %v732
  %741 = vst [vmem:[%s8 + $0x8] sm:$0xff] %v733
  %742 = vst [vmem:[%s8 + $0x10] sm:$0xff] %v734
  %743 = vst [vmem:[%s8 + $0x18] sm:$0xff] %v735
  %744 = vst [vmem:[%s8 + $0x20] sm:$0xff] %v736
  %745 = vst [vmem:[%s8 + $0x28] sm:$0xff] %v737
  %746 = vst [vmem:[%s8 + $0x30] sm:$0xff] %v738
  %747 = vst [vmem:[%s8 + $0x38] sm:$0xff] %v739
  // Predicated region
  $region34: #{spatial_attention_forward.13} parent=0 // pred_check
    _
  $region35: #{spatial_attention_forward.13} parent=0 // pred_check_branch
    %749 = sbr.rel (0) target = $region37
  $region36: #{spatial_attention_forward.13} parent=0 // pred_region
    _
  $region37: #{spatial_attention_forward.13} parent=0 // pred_fallthru
    _
  // Predicated region
  $region38: #{spatial_attention_forward.13} parent=0 // pred_check
    _
  $region39: #{spatial_attention_forward.13} parent=0 // pred_check_branch
    %751 = sbr.rel (0) target = $region41
  $region40: #{spatial_attention_forward.13} parent=0 // pred_region
    _
  $region41: #{spatial_attention_forward.13} parent=0 // pred_fallthru
    _

</llo_original>
